<compile_context>
chip_gen: v6e
topology: v6e:2x2x1
jax: 0.10.0
libtpu: 0.0.40
codegen_flags: <defaults>
</compile_context>

<pallas_src>
import math
from functools import partial

import jax
import jax.numpy as jnp
from jax.experimental import pallas as pl
from jax.experimental.pallas import tpu as pltpu  # noqa: F401  (TPU backend import)


# ----------------------------------------------------------------------------
# Pallas kernel: full MultiHeadAttention forward for the whole batch
# ----------------------------------------------------------------------------
def mha_kernel(x_ref,
               wqkv_ref, bqkv_ref, wo_ref, bo_ref, gamma_ref, beta_ref,
               out_ref,
               *, num_heads, key_dim, batch, seq):
    hk = num_heads * key_dim
    x2 = x_ref[...].astype(jnp.float32)                         # (B*S, D)

    # One fused QKV projection (single MXU push).  The 1/sqrt(key_dim) scale is
    # already folded into the Q columns of wqkv / bqkv.
    qkv = jnp.dot(x2, wqkv_ref[...],
                  preferred_element_type=jnp.float32) + bqkv_ref[...]   # (B*S, 3*H*kd)

    def split_heads(t2):
        # (B*S, H*kd) -> (B*H, S, kd), batch index = b*H + h.
        # Static lane slices + leading-dim reshapes/stack only.
        parts = [t2[:, h * key_dim:(h + 1) * key_dim].reshape(batch, seq, key_dim)
                 for h in range(num_heads)]
        return jnp.stack(parts, axis=1).reshape(batch * num_heads, seq, key_dim)

    q = split_heads(qkv[:, 0:hk])
    k = split_heads(qkv[:, hk:2 * hk])
    v = split_heads(qkv[:, 2 * hk:3 * hk])

    # Head-batched scaled dot-product attention, softmax over the key axis.
    # TODO(synk): the optional mask path of Attention is not implemented (mask=None assumed).
    s = jnp.einsum('bqd,bkd->bqk', q, k,
                   preferred_element_type=jnp.float32)           # (B*H, S, S)
    s = s - jnp.max(s, axis=-1, keepdims=True)
    p = jnp.exp(s)
    p = p / jnp.sum(p, axis=-1, keepdims=True)                   # exact normalization
    o = jnp.einsum('bqk,bkd->bqd', p, v,
                   preferred_element_type=jnp.float32)           # (B*H, S, kd)

    # Merge heads back to (B*S, H*kd) and apply the output Dense with one K=hk matmul.
    o4 = o.reshape(batch, num_heads, seq, key_dim)
    o2 = jnp.concatenate(
        [o4[:, h].reshape(batch * seq, key_dim) for h in range(num_heads)], axis=-1)
    mh = jnp.dot(o2, wo_ref[...],
                 preferred_element_type=jnp.float32) + bo_ref[...]

    # TODO(synk): dropout(p=drop_out_proba) is identity at inference (eval mode).
    y = x2 + mh                                                  # residual (in_dim == out_dim)

    # nn.LayerNorm(out_dim): biased variance over last dim, eps=1e-5
    mu = jnp.mean(y, axis=-1, keepdims=True)
    var = jnp.mean((y - mu) ** 2, axis=-1, keepdims=True)
    out = (y - mu) * jax.lax.rsqrt(var + 1e-5) * gamma_ref[...] + beta_ref[...]

    out_ref[...] = out.astype(out_ref.dtype)


# ----------------------------------------------------------------------------
# parameter fusion (wrapper side: concat QKV weights, fold the 1/sqrt(kd) scale)
# ----------------------------------------------------------------------------
def fuse_mha_params(params, key_dim):
    wq, bq, wk, bk, wv, bv, wo, bo, gamma, beta = params
    scale = 1.0 / math.sqrt(key_dim)
    w_qkv = jnp.concatenate([wq * scale, wk, wv], axis=1)        # (D, 3*H*kd)
    b_qkv = jnp.concatenate([bq * scale, bk, bv], axis=1)        # (1, 3*H*kd)
    return (w_qkv, b_qkv, wo, bo, gamma, beta)


# ----------------------------------------------------------------------------
# wrapper
# ----------------------------------------------------------------------------
def multi_head_attention(x, params, num_heads, key_dim):
    B, S, D = x.shape
    x2 = x.reshape(B * S, D)                                     # free, contiguous reshape
    fused = fuse_mha_params(params, key_dim)

    out2 = pl.pallas_call(
        partial(mha_kernel, num_heads=num_heads, key_dim=key_dim, batch=B, seq=S),
        out_shape=jax.ShapeDtypeStruct((B * S, D), x.dtype),
        # no grid / no BlockSpecs: single invocation, whole operands resident in VMEM
    )(x2, *fused)
    return out2.reshape(B, S, D)


# ----------------------------------------------------------------------------
# parameter init (mirrors the PyTorch module's __init__)
# ----------------------------------------------------------------------------
def xavier_uniform(key, fan_in, fan_out):
    limit = math.sqrt(6.0 / (fan_in + fan_out))
    # stored pre-transposed: (in, out) so kernels do x @ W
    return jax.random.uniform(key, (fan_in, fan_out), jnp.float32, -limit, limit)


def init_mha_params(key, in_dim, key_dim, out_dim, num_heads):
    keys = jax.random.split(key, 3 * num_heads + 1)
    # each head has its own Q/K/V Dense(in_dim -> key_dim); store them concatenated
    wq = jnp.concatenate([xavier_uniform(keys[3 * h + 0], in_dim, key_dim)
                          for h in range(num_heads)], axis=1)
    wk = jnp.concatenate([xavier_uniform(keys[3 * h + 1], in_dim, key_dim)
                          for h in range(num_heads)], axis=1)
    wv = jnp.concatenate([xavier_uniform(keys[3 * h + 2], in_dim, key_dim)
                          for h in range(num_heads)], axis=1)
    hk = num_heads * key_dim
    bq = jnp.zeros((1, hk), jnp.float32)
    bk = jnp.zeros((1, hk), jnp.float32)
    bv = jnp.zeros((1, hk), jnp.float32)
    wo = xavier_uniform(keys[-1], hk, out_dim)                   # output Dense
    bo = jnp.zeros((1, out_dim), jnp.float32)
    gamma = jnp.ones((1, out_dim), jnp.float32)                  # nn.LayerNorm affine defaults
    beta = jnp.zeros((1, out_dim), jnp.float32)
    return (wq, bq, wk, bk, wv, bv, wo, bo, gamma, beta)


# ----------------------------------------------------------------------------
# pure-JAX reference (same math as the PyTorch module) for a correctness check
# ----------------------------------------------------------------------------
def ref_mha(x, params, num_heads, key_dim):
    wq, bq, wk, bk, wv, bv, wo, bo, gamma, beta = params
    heads = []
    for h in range(num_heads):
        sl = slice(h * key_dim, (h + 1) * key_dim)
        q = x @ wq[:, sl] + bq[:, sl]
        k = x @ wk[:, sl] + bk[:, sl]
        v = x @ wv[:, sl] + bv[:, sl]
        q = q / (q.shape[-1] ** 0.5)
        s = jnp.einsum('bqd,bkd->bqk', q, k)
        p = jax.nn.softmax(s, axis=-1)
        heads.append(jnp.einsum('bqk,bkd->bqd', p, v))
    concat = jnp.concatenate(heads, axis=-1)
    out = concat @ wo + bo                                       # output dense (dropout = identity)
    y = x + out
    mu = jnp.mean(y, axis=-1, keepdims=True)
    var = jnp.mean((y - mu) ** 2, axis=-1, keepdims=True)
    return (y - mu) * jax.lax.rsqrt(var + 1e-5) * gamma + beta


# ----------------------------------------------------------------------------
if __name__ == "__main__":
    # module config: MultiHeadAttention(in_dim=32, key_dim=8, out_dim=32,
    #                                   num_heads=4, drop_out_proba=0.1)
    B, S = 2, 8
    in_dim = out_dim = 32
    key_dim = 8
    num_heads = 4

    root = jax.random.PRNGKey(0)
    kx, kp = jax.random.split(root)
    x = jax.random.normal(kx, (B, S, in_dim), jnp.float32)
    params = init_mha_params(kp, in_dim, key_dim, out_dim, num_heads)

    out = multi_head_attention(x, params, num_heads, key_dim)
    out = jax.block_until_ready(out)

    ref = ref_mha(x, params, num_heads, key_dim)
    err = float(jnp.max(jnp.abs(out - ref)))
    assert err < 2e-3, f"mismatch vs reference: {err}"

    print("KERNEL_OK")
</pallas_src>

<mosaic_0001>
module attributes {stable_mosaic.version = 11 : i64} {
  func.func @mha_kernel(%arg0: memref<16x32xf32, #tpu.memory_space<vmem>>, %arg1: memref<32x96xf32, #tpu.memory_space<vmem>>, %arg2: memref<1x96xf32, #tpu.memory_space<vmem>>, %arg3: memref<32x32xf32, #tpu.memory_space<vmem>>, %arg4: memref<1x32xf32, #tpu.memory_space<vmem>>, %arg5: memref<1x32xf32, #tpu.memory_space<vmem>>, %arg6: memref<1x32xf32, #tpu.memory_space<vmem>>, %arg7: memref<16x32xf32, #tpu.memory_space<vmem>>) attributes {dimension_semantics = [], scalar_prefetch = 0 : i64, scratch_operands = 0 : i64, tpu.core_type = #tpu.core_type<tc>} {
    %c0 = arith.constant 0 : index
    %c0_0 = arith.constant 0 : index
    %0 = vector.load %arg0[%c0, %c0_0] : memref<16x32xf32, #tpu.memory_space<vmem>>, vector<16x32xf32>
    %c0_1 = arith.constant 0 : index
    %c0_2 = arith.constant 0 : index
    %1 = vector.load %arg1[%c0_1, %c0_2] : memref<32x96xf32, #tpu.memory_space<vmem>>, vector<32x96xf32>
    %cst = arith.constant dense<0.000000e+00> : vector<16x96xf32>
    %2 = tpu.matmul %0, %1, %cst {dimension_numbers = #tpu.dot_dimension_numbers<[1], [0], [0], [1], [0, 0, 1, 1], [], []>} : vector<16x32xf32>, vector<32x96xf32>, vector<16x96xf32> -> vector<16x96xf32>
    %c0_3 = arith.constant 0 : index
    %c0_4 = arith.constant 0 : index
    %3 = vector.load %arg2[%c0_3, %c0_4] : memref<1x96xf32, #tpu.memory_space<vmem>>, vector<1x96xf32>
    %4 = vector.broadcast %3 : vector<1x96xf32> to vector<16x96xf32>
    %5 = arith.addf %2, %4 : vector<16x96xf32>
    %6 = vector.extract_strided_slice %5 {offsets = [0, 0], sizes = [16, 32], strides = [1, 1]} : vector<16x96xf32> to vector<16x32xf32>
    %7 = vector.extract_strided_slice %6 {offsets = [0, 0], sizes = [16, 8], strides = [1, 1]} : vector<16x32xf32> to vector<16x8xf32>
    %8 = vector.shape_cast %7 : vector<16x8xf32> to vector<2x8x8xf32>
    %9 = vector.extract_strided_slice %6 {offsets = [0, 8], sizes = [16, 8], strides = [1, 1]} : vector<16x32xf32> to vector<16x8xf32>
    %10 = vector.shape_cast %9 : vector<16x8xf32> to vector<2x8x8xf32>
    %11 = vector.extract_strided_slice %6 {offsets = [0, 16], sizes = [16, 8], strides = [1, 1]} : vector<16x32xf32> to vector<16x8xf32>
    %12 = vector.shape_cast %11 : vector<16x8xf32> to vector<2x8x8xf32>
    %13 = vector.extract_strided_slice %6 {offsets = [0, 24], sizes = [16, 8], strides = [1, 1]} : vector<16x32xf32> to vector<16x8xf32>
    %14 = vector.shape_cast %13 : vector<16x8xf32> to vector<2x8x8xf32>
    %15 = vector.shape_cast %8 : vector<2x8x8xf32> to vector<2x1x8x8xf32>
    %16 = vector.shape_cast %10 : vector<2x8x8xf32> to vector<2x1x8x8xf32>
    %17 = vector.shape_cast %12 : vector<2x8x8xf32> to vector<2x1x8x8xf32>
    %18 = vector.shape_cast %14 : vector<2x8x8xf32> to vector<2x1x8x8xf32>
    %19 = tpu.concatenate %15, %16, %17, %18 in 1 : vector<2x1x8x8xf32>, vector<2x1x8x8xf32>, vector<2x1x8x8xf32>, vector<2x1x8x8xf32> -> vector<2x4x8x8xf32>
    %20 = vector.shape_cast %19 : vector<2x4x8x8xf32> to vector<8x8x8xf32>
    %21 = vector.extract_strided_slice %5 {offsets = [0, 32], sizes = [16, 32], strides = [1, 1]} : vector<16x96xf32> to vector<16x32xf32>
    %22 = vector.extract_strided_slice %21 {offsets = [0, 0], sizes = [16, 8], strides = [1, 1]} : vector<16x32xf32> to vector<16x8xf32>
    %23 = vector.shape_cast %22 : vector<16x8xf32> to vector<2x8x8xf32>
    %24 = vector.extract_strided_slice %21 {offsets = [0, 8], sizes = [16, 8], strides = [1, 1]} : vector<16x32xf32> to vector<16x8xf32>
    %25 = vector.shape_cast %24 : vector<16x8xf32> to vector<2x8x8xf32>
    %26 = vector.extract_strided_slice %21 {offsets = [0, 16], sizes = [16, 8], strides = [1, 1]} : vector<16x32xf32> to vector<16x8xf32>
    %27 = vector.shape_cast %26 : vector<16x8xf32> to vector<2x8x8xf32>
    %28 = vector.extract_strided_slice %21 {offsets = [0, 24], sizes = [16, 8], strides = [1, 1]} : vector<16x32xf32> to vector<16x8xf32>
    %29 = vector.shape_cast %28 : vector<16x8xf32> to vector<2x8x8xf32>
    %30 = vector.shape_cast %23 : vector<2x8x8xf32> to vector<2x1x8x8xf32>
    %31 = vector.shape_cast %25 : vector<2x8x8xf32> to vector<2x1x8x8xf32>
    %32 = vector.shape_cast %27 : vector<2x8x8xf32> to vector<2x1x8x8xf32>
    %33 = vector.shape_cast %29 : vector<2x8x8xf32> to vector<2x1x8x8xf32>
    %34 = tpu.concatenate %30, %31, %32, %33 in 1 : vector<2x1x8x8xf32>, vector<2x1x8x8xf32>, vector<2x1x8x8xf32>, vector<2x1x8x8xf32> -> vector<2x4x8x8xf32>
    %35 = vector.shape_cast %34 : vector<2x4x8x8xf32> to vector<8x8x8xf32>
    %36 = vector.extract_strided_slice %5 {offsets = [0, 64], sizes = [16, 32], strides = [1, 1]} : vector<16x96xf32> to vector<16x32xf32>
    %37 = vector.extract_strided_slice %36 {offsets = [0, 0], sizes = [16, 8], strides = [1, 1]} : vector<16x32xf32> to vector<16x8xf32>
    %38 = vector.shape_cast %37 : vector<16x8xf32> to vector<2x8x8xf32>
    %39 = vector.extract_strided_slice %36 {offsets = [0, 8], sizes = [16, 8], strides = [1, 1]} : vector<16x32xf32> to vector<16x8xf32>
    %40 = vector.shape_cast %39 : vector<16x8xf32> to vector<2x8x8xf32>
    %41 = vector.extract_strided_slice %36 {offsets = [0, 16], sizes = [16, 8], strides = [1, 1]} : vector<16x32xf32> to vector<16x8xf32>
    %42 = vector.shape_cast %41 : vector<16x8xf32> to vector<2x8x8xf32>
    %43 = vector.extract_strided_slice %36 {offsets = [0, 24], sizes = [16, 8], strides = [1, 1]} : vector<16x32xf32> to vector<16x8xf32>
    %44 = vector.shape_cast %43 : vector<16x8xf32> to vector<2x8x8xf32>
    %45 = vector.shape_cast %38 : vector<2x8x8xf32> to vector<2x1x8x8xf32>
    %46 = vector.shape_cast %40 : vector<2x8x8xf32> to vector<2x1x8x8xf32>
    %47 = vector.shape_cast %42 : vector<2x8x8xf32> to vector<2x1x8x8xf32>
    %48 = vector.shape_cast %44 : vector<2x8x8xf32> to vector<2x1x8x8xf32>
    %49 = tpu.concatenate %45, %46, %47, %48 in 1 : vector<2x1x8x8xf32>, vector<2x1x8x8xf32>, vector<2x1x8x8xf32>, vector<2x1x8x8xf32> -> vector<2x4x8x8xf32>
    %50 = vector.shape_cast %49 : vector<2x4x8x8xf32> to vector<8x8x8xf32>
    "tpu.trace_start"() <{level = 10 : i32, message = "bqd,bkd->bqk"}> : () -> ()
    %cst_5 = arith.constant dense<0.000000e+00> : vector<8x8x8xf32>
    %51 = tpu.matmul %20, %35, %cst_5 {dimension_numbers = #tpu.dot_dimension_numbers<[2], [2], [1], [1], [0, 0, 0, 1, 1, 1], [0], [0]>} : vector<8x8x8xf32>, vector<8x8x8xf32>, vector<8x8x8xf32> -> vector<8x8x8xf32>
    "tpu.trace_stop"() : () -> ()
    %cst_6 = arith.constant dense<0xFF800000> : vector<8x8xf32>
    %52 = vector.multi_reduction <maximumf>, %51, %cst_6 [2] : vector<8x8x8xf32> to vector<8x8xf32>
    %53 = vector.shape_cast %52 : vector<8x8xf32> to vector<8x8x1xf32>
    %54 = vector.broadcast %53 : vector<8x8x1xf32> to vector<8x8x8xf32>
    %55 = arith.subf %51, %54 : vector<8x8x8xf32>
    %56 = math.exp %55 : vector<8x8x8xf32>
    %cst_7 = arith.constant dense<0.000000e+00> : vector<8x8xf32>
    %57 = vector.multi_reduction <add>, %56, %cst_7 [2] : vector<8x8x8xf32> to vector<8x8xf32>
    %58 = vector.shape_cast %57 : vector<8x8xf32> to vector<8x8x1xf32>
    %59 = vector.broadcast %58 : vector<8x8x1xf32> to vector<8x8x8xf32>
    %60 = arith.divf %56, %59 : vector<8x8x8xf32>
    "tpu.trace_start"() <{level = 10 : i32, message = "bqk,bkd->bqd"}> : () -> ()
    %cst_8 = arith.constant dense<0.000000e+00> : vector<8x8x8xf32>
    %61 = tpu.matmul %60, %50, %cst_8 {dimension_numbers = #tpu.dot_dimension_numbers<[2], [1], [1], [2], [0, 0, 0, 1, 1, 2], [0], [0]>} : vector<8x8x8xf32>, vector<8x8x8xf32>, vector<8x8x8xf32> -> vector<8x8x8xf32>
    "tpu.trace_stop"() : () -> ()
    %62 = vector.shape_cast %61 : vector<8x8x8xf32> to vector<2x4x8x8xf32>
    %63 = vector.extract_strided_slice %62 {offsets = [0, 0, 0, 0], sizes = [2, 1, 8, 8], strides = [1, 1, 1, 1]} : vector<2x4x8x8xf32> to vector<2x1x8x8xf32>
    %64 = vector.shape_cast %63 : vector<2x1x8x8xf32> to vector<2x8x8xf32>
    %65 = vector.shape_cast %64 : vector<2x8x8xf32> to vector<16x8xf32>
    %66 = vector.extract_strided_slice %62 {offsets = [0, 1, 0, 0], sizes = [2, 1, 8, 8], strides = [1, 1, 1, 1]} : vector<2x4x8x8xf32> to vector<2x1x8x8xf32>
    %67 = vector.shape_cast %66 : vector<2x1x8x8xf32> to vector<2x8x8xf32>
    %68 = vector.shape_cast %67 : vector<2x8x8xf32> to vector<16x8xf32>
    %69 = vector.extract_strided_slice %62 {offsets = [0, 2, 0, 0], sizes = [2, 1, 8, 8], strides = [1, 1, 1, 1]} : vector<2x4x8x8xf32> to vector<2x1x8x8xf32>
    %70 = vector.shape_cast %69 : vector<2x1x8x8xf32> to vector<2x8x8xf32>
    %71 = vector.shape_cast %70 : vector<2x8x8xf32> to vector<16x8xf32>
    %72 = vector.extract_strided_slice %62 {offsets = [0, 3, 0, 0], sizes = [2, 1, 8, 8], strides = [1, 1, 1, 1]} : vector<2x4x8x8xf32> to vector<2x1x8x8xf32>
    %73 = vector.shape_cast %72 : vector<2x1x8x8xf32> to vector<2x8x8xf32>
    %74 = vector.shape_cast %73 : vector<2x8x8xf32> to vector<16x8xf32>
    %75 = tpu.concatenate %65, %68, %71, %74 in 1 : vector<16x8xf32>, vector<16x8xf32>, vector<16x8xf32>, vector<16x8xf32> -> vector<16x32xf32>
    %c0_9 = arith.constant 0 : index
    %c0_10 = arith.constant 0 : index
    %76 = vector.load %arg3[%c0_9, %c0_10] : memref<32x32xf32, #tpu.memory_space<vmem>>, vector<32x32xf32>
    %cst_11 = arith.constant dense<0.000000e+00> : vector<16x32xf32>
    %77 = tpu.matmul %75, %76, %cst_11 {dimension_numbers = #tpu.dot_dimension_numbers<[1], [0], [0], [1], [0, 0, 1, 1], [], []>} : vector<16x32xf32>, vector<32x32xf32>, vector<16x32xf32> -> vector<16x32xf32>
    %c0_12 = arith.constant 0 : index
    %c0_13 = arith.constant 0 : index
    %78 = vector.load %arg4[%c0_12, %c0_13] : memref<1x32xf32, #tpu.memory_space<vmem>>, vector<1x32xf32>
    %79 = vector.broadcast %78 : vector<1x32xf32> to vector<16x32xf32>
    %80 = arith.addf %77, %79 : vector<16x32xf32>
    %81 = arith.addf %0, %80 : vector<16x32xf32>
    %cst_14 = arith.constant dense<0.000000e+00> : vector<16xf32>
    %82 = vector.multi_reduction <add>, %81, %cst_14 [1] : vector<16x32xf32> to vector<16xf32>
    %83 = vector.shape_cast %82 : vector<16xf32> to vector<16x1xf32>
    %cst_15 = arith.constant 3.200000e+01 : f32
    %84 = vector.broadcast %cst_15 : f32 to vector<16x1xf32>
    %85 = arith.divf %83, %84 : vector<16x1xf32>
    %86 = vector.broadcast %85 : vector<16x1xf32> to vector<16x32xf32>
    %87 = arith.subf %81, %86 : vector<16x32xf32>
    %88 = arith.mulf %87, %87 : vector<16x32xf32>
    %cst_16 = arith.constant dense<0.000000e+00> : vector<16xf32>
    %89 = vector.multi_reduction <add>, %88, %cst_16 [1] : vector<16x32xf32> to vector<16xf32>
    %90 = vector.shape_cast %89 : vector<16xf32> to vector<16x1xf32>
    %cst_17 = arith.constant 3.200000e+01 : f32
    %91 = vector.broadcast %cst_17 : f32 to vector<16x1xf32>
    %92 = arith.divf %90, %91 : vector<16x1xf32>
    %93 = vector.broadcast %85 : vector<16x1xf32> to vector<16x32xf32>
    %94 = arith.subf %81, %93 : vector<16x32xf32>
    %cst_18 = arith.constant 9.99999974E-6 : f32
    %95 = vector.broadcast %cst_18 : f32 to vector<16x1xf32>
    %96 = arith.addf %92, %95 : vector<16x1xf32>
    %97 = math.rsqrt %96 : vector<16x1xf32>
    %98 = vector.broadcast %97 : vector<16x1xf32> to vector<16x32xf32>
    %99 = arith.mulf %94, %98 : vector<16x32xf32>
    %c0_19 = arith.constant 0 : index
    %c0_20 = arith.constant 0 : index
    %100 = vector.load %arg5[%c0_19, %c0_20] : memref<1x32xf32, #tpu.memory_space<vmem>>, vector<1x32xf32>
    %101 = vector.broadcast %100 : vector<1x32xf32> to vector<16x32xf32>
    %102 = arith.mulf %99, %101 : vector<16x32xf32>
    %c0_21 = arith.constant 0 : index
    %c0_22 = arith.constant 0 : index
    %103 = vector.load %arg6[%c0_21, %c0_22] : memref<1x32xf32, #tpu.memory_space<vmem>>, vector<1x32xf32>
    %104 = vector.broadcast %103 : vector<1x32xf32> to vector<16x32xf32>
    %105 = arith.addf %102, %104 : vector<16x32xf32>
    %c0_23 = arith.constant 0 : index
    %c0_24 = arith.constant 0 : index
    %106 = vector.load %arg7[%c0_23, %c0_24] : memref<16x32xf32, #tpu.memory_space<vmem>>, vector<16x32xf32>
    tpu.vector_store %arg7[%c0_23, %c0_24], %105 {strides = array<i32>} : memref<16x32xf32, #tpu.memory_space<vmem>>, vector<16x32xf32>,
    return
  }
}

</mosaic_0001>

<llo_original>
// kernel: tpu_custom_call.1
$region0: #{tpu_custom_call.1}
  #allocation0 [shape = 'u32[]', space=smem, size = 0x4, offset = 0x4, fixed_abs, tag = 'smem constant byte address 0x4 - core index']
  #allocation1 [shape = 'u32[144,128]{1,0:T(1,128)}', space=vmem, size = 0x12000, scoped, tag = 'internal scratch']
  %s0 = inlined_call_operand.hbm [shape: f32[16,32], index: 0, kind: input, shape index: {}]
  %s1 = inlined_call_operand.hbm [shape: f32[32,96], index: 1, kind: input, shape index: {}]
  %s2 = inlined_call_operand.vmem [shape: f32[1,96], index: 2, kind: input, shape index: {}]
  %s3 = inlined_call_operand.hbm [shape: f32[32,32], index: 3, kind: input, shape index: {}]
  %s4 = inlined_call_operand.vmem [shape: f32[1,32], index: 4, kind: input, shape index: {}]
  %s5 = inlined_call_operand.vmem [shape: f32[1,32], index: 5, kind: input, shape index: {}]
  %s6 = inlined_call_operand.vmem [shape: f32[1,32], index: 6, kind: input, shape index: {}]
  %s7 = inlined_call_operand.hbm [shape: f32[16,32], index: 7, kind: output, shape index: {}]
  %s8 = sld [smem:[#allocation0]]
  $region50: #{tpu_custom_call.1} parent=0
    _
  %s10 = ssub.s32 1, %s8
  %s11 = scalar_select 0, %s10, %s8
  $region1: #{tpu_custom_call.1} parent=0
    #allocation2 [shape = 'u8[8192]{0}', space=vmem, size = 0x2000, scoped, tag = 'input window, operand 0, single buffered']
    #allocation3 [shape = 's32[1]{0}', space=sflag, size = 0x4, scoped, tag = 'scoped memory for tpu_custom_call.1']
    #allocation4 [shape = 's32[1]{0}', space=sflag, size = 0x4, scoped, tag = 'scoped memory for tpu_custom_call.1']
    #allocation5 [shape = 'u8[16384]{0}', space=vmem, size = 0x4000, scoped, tag = 'input window, operand 1, single buffered']
    #allocation6 [shape = 's32[1]{0}', space=sflag, size = 0x4, scoped, tag = 'scoped memory for tpu_custom_call.1']
    #allocation7 [shape = 'u8[16384]{0}', space=vmem, size = 0x4000, scoped, tag = 'input window, operand 3, single buffered']
    #allocation8 [shape = 'u8[8192]{0}', space=vmem, size = 0x2000, scoped, tag = 'output window, operand 0, single buffered']
    %12 = vsyncpa [#allocation3], 0
    %13 = vsyncpa [#allocation6], 0
    %14 = vsyncpa [#allocation4], 0
    // Predicated region
    $region2: #{tpu_custom_call.1} parent=1 // pred_check
      _
    $region3: #{tpu_custom_call.1} parent=1 // pred_check_branch
      %16 = sbr.rel (0) target = $region5
    $region4: #{tpu_custom_call.1} parent=1 // pred_region
      %s18 = ssub.s32 256, 256
      %19 = vsyncadd [#allocation3], %s18
      %s20 = sshll.u32 [#allocation2], 4
      %s21 = int_to_ptr.vmem [resolvable:$true] %s20
      %26 = dma.hbm_to_vmem [thread:$0]  %s0, 256, %s21, [#allocation3], 128, 128, 8
    $region5: #{tpu_custom_call.1} parent=1 // pred_fallthru
      _
    // Predicated region
    $region6: #{tpu_custom_call.1} parent=1 // pred_check
      _
    $region7: #{tpu_custom_call.1} parent=1 // pred_check_branch
      %28 = sbr.rel (0) target = $region9
    $region8: #{tpu_custom_call.1} parent=1 // pred_region
      %s30 = ssub.s32 512, 512
      %31 = vsyncadd [#allocation6], %s30
      %s32 = sshll.u32 [#allocation5], 4
      %s33 = int_to_ptr.vmem [resolvable:$true] %s32
      %38 = dma.hbm_to_vmem [thread:$0]  %s1, 512, %s33, [#allocation6], 128, 128, 8
    $region9: #{tpu_custom_call.1} parent=1 // pred_fallthru
      _
    // Predicated region
    $region10: #{tpu_custom_call.1} parent=1 // pred_check
      _
    $region11: #{tpu_custom_call.1} parent=1 // pred_check_branch
      %40 = sbr.rel (0) target = $region13
    $region12: #{tpu_custom_call.1} parent=1 // pred_region
      _
    $region13: #{tpu_custom_call.1} parent=1 // pred_fallthru
      _
    // Predicated region
    $region14: #{tpu_custom_call.1} parent=1 // pred_check
      _
    $region15: #{tpu_custom_call.1} parent=1 // pred_check_branch
      %42 = sbr.rel (0) target = $region17
    $region16: #{tpu_custom_call.1} parent=1 // pred_region
      %s44 = ssub.s32 512, 512
      %45 = vsyncadd [#allocation6], %s44
      %s46 = sshll.u32 [#allocation7], 4
      %s47 = int_to_ptr.vmem [resolvable:$true] %s46
      %52 = dma.hbm_to_vmem [thread:$0]  %s3, 512, %s47, [#allocation6], 128, 128, 8
    $region17: #{tpu_custom_call.1} parent=1 // pred_fallthru
      _
    // Predicated region
    $region18: #{tpu_custom_call.1} parent=1 // pred_check
      _
    $region19: #{tpu_custom_call.1} parent=1 // pred_check_branch
      %54 = sbr.rel (0) target = $region21
    $region20: #{tpu_custom_call.1} parent=1 // pred_region
      _
    $region21: #{tpu_custom_call.1} parent=1 // pred_fallthru
      _
    // Predicated region
    $region22: #{tpu_custom_call.1} parent=1 // pred_check
      _
    $region23: #{tpu_custom_call.1} parent=1 // pred_check_branch
      %56 = sbr.rel (0) target = $region25
    $region24: #{tpu_custom_call.1} parent=1 // pred_region
      _
    $region25: #{tpu_custom_call.1} parent=1 // pred_fallthru
      _
    // Predicated region
    $region26: #{tpu_custom_call.1} parent=1 // pred_check
      _
    $region27: #{tpu_custom_call.1} parent=1 // pred_check_branch
      %58 = sbr.rel (0) target = $region29
    $region28: #{tpu_custom_call.1} parent=1 // pred_region
      _
    $region29: #{tpu_custom_call.1} parent=1 // pred_fallthru
      _
    // Predicated region
    $region30: #{tpu_custom_call.1} parent=1 // pred_check
      _
    $region31: #{tpu_custom_call.1} parent=1 // pred_check_branch
      %60 = sbr.rel (0) target = $region33
    $region32: #{tpu_custom_call.1} parent=1 // pred_region
      %61 = dma.done [#allocation3], 256
    $region33: #{tpu_custom_call.1} parent=1 // pred_fallthru
      _
    // Predicated region
    $region34: #{tpu_custom_call.1} parent=1 // pred_check
      _
    $region35: #{tpu_custom_call.1} parent=1 // pred_check_branch
      %63 = sbr.rel (0) target = $region37
    $region36: #{tpu_custom_call.1} parent=1 // pred_region
      %64 = dma.done [#allocation6], 512
    $region37: #{tpu_custom_call.1} parent=1 // pred_fallthru
      _
    // Predicated region
    $region38: #{tpu_custom_call.1} parent=1 // pred_check
      _
    $region39: #{tpu_custom_call.1} parent=1 // pred_check_branch
      %66 = sbr.rel (0) target = $region41
    $region40: #{tpu_custom_call.1} parent=1 // pred_region
      %67 = dma.done [#allocation6], 512
    $region41: #{tpu_custom_call.1} parent=1 // pred_fallthru
      _
    %v68 = vld [vmem:[#allocation2] sm:$0xff]
    %v69 = vld [vmem:[#allocation2 + $0x8] sm:$0xff]
    %v70 = vld [vmem:[#allocation5] sm:$0xff]
    %v71 = vld [vmem:[#allocation5 + $0x8] sm:$0xff]
    %v72 = vld [vmem:[#allocation5 + $0x10] sm:$0xff]
    %v73 = vld [vmem:[#allocation5 + $0x18] sm:$0xff]
    %v74 = vld [vmem:[%s2] sm:$0x1]
    %v76 = vlaneseq
    %v77 = vshrl.u32 %v76, 7
    %v78 = vsub.s32 0, %v77
    %v79 = vrot.slane %v74, %v78
    %vm81 = vcmask 261120
    %v83 = vsel %vm81, %v68, 0
    %v86 = vsel %vm81, %v69, 0
    %88 = vmatprep.subr.mxu0 0.0
    %89 = vmatpush1.msra.mxu0 0.0
    %90 = vmatprep.subr.mxu0 0.0
    %91 = vmatpush1.msra.mxu0 0.0
    %92 = vmatprep.subr.mxu0 0.0
    %93 = vmatpush1.msra.mxu0 0.0
    %94 = vmatprep.subr.mxu0 0.0
    %95 = vmatpush1.msra.mxu0 0.0
    %96 = vmatprep.subr.mxu0 0.0
    %97 = vmatpush1.msra.mxu0 0.0
    %98 = vmatprep.subr.mxu0 0.0
    %99 = vmatpush1.msra.mxu0 0.0
    %100 = vmatprep.subr.mxu0 0.0
    %101 = vmatpush1.msra.mxu0 0.0
    %102 = vmatprep.subr.mxu0 0.0
    %103 = vmatpush1.msra.mxu0 0.0
    %104 = vmatprep.subr.mxu0 0.0
    %105 = vmatpush1.msra.mxu0 0.0
    %106 = vmatprep.subr.mxu0 0.0
    %107 = vmatpush1.msra.mxu0 0.0
    %108 = vmatprep.subr.mxu0 0.0
    %109 = vmatpush1.msra.mxu0 0.0
    %110 = vmatprep.subr.mxu0 0.0
    %111 = vmatpush1.msra.mxu0 0.0
    %112 = vmatprep.subr.mxu0 0.0
    %113 = vmatpush1.msra.mxu0 %v73
    %114 = vmatprep.subr.mxu0 0.0
    %115 = vmatpush1.msra.mxu0 %v72
    %116 = vmatprep.subr.mxu0 0.0
    %117 = vmatpush1.msra.mxu0 %v71
    %118 = vmatprep.subr.mxu0 0.0
    %119 = vmatpush1.msra.mxu0 %v70
    %120 = vmatprep.subr.mxu0 0.0
    %121 = vmatpush2.msra.mxu0 0.0
    %122 = vmatprep.subr.mxu0 0.0
    %123 = vmatpush2.msra.mxu0 0.0
    %124 = vmatprep.subr.mxu0 0.0
    %125 = vmatpush2.msra.mxu0 0.0
    %126 = vmatprep.subr.mxu0 0.0
    %127 = vmatpush2.msra.mxu0 0.0
    %128 = vmatprep.subr.mxu0 0.0
    %129 = vmatpush2.msra.mxu0 0.0
    %130 = vmatprep.subr.mxu0 0.0
    %131 = vmatpush2.msra.mxu0 0.0
    %132 = vmatprep.subr.mxu0 0.0
    %133 = vmatpush2.msra.mxu0 0.0
    %134 = vmatprep.subr.mxu0 0.0
    %135 = vmatpush2.msra.mxu0 0.0
    %136 = vmatprep.subr.mxu0 0.0
    %137 = vmatpush2.msra.mxu0 0.0
    %138 = vmatprep.subr.mxu0 0.0
    %139 = vmatpush2.msra.mxu0 0.0
    %140 = vmatprep.subr.mxu0 0.0
    %141 = vmatpush2.msra.mxu0 0.0
    %142 = vmatprep.subr.mxu0 0.0
    %143 = vmatpush2.msra.mxu0 0.0
    %144 = vmatprep.subr.mxu0 0.0
    %145 = vmatpush2.msra.mxu0 0.0
    %146 = vmatprep.subr.mxu0 0.0
    %147 = vmatpush2.msra.mxu0 0.0
    %148 = vmatprep.subr.mxu0 0.0
    %149 = vmatpush2.msra.mxu0 0.0
    %150 = vmatprep.subr.mxu0 0.0
    %151 = vmatpush2.msra.mxu0 0.0
    %152 = vmatprep.mubr.f32.mxu0 0.0
    %153 = vmatmul.mubr.f32.gmra.mxu0 %v83
    %v154 = vpop.f32.mrf.mxu0
    %v155 = vadd.f32 %v79, %v154
    %v156 = vpop.f32.mrf.mxu0
    %157 = vmatprep.mubr.f32.mxu0 0.0
    %158 = vmatmul.mubr.f32.gmra.mxu0 %v86
    %v159 = vpop.f32.mrf.mxu0
    %v160 = vadd.f32 %v79, %v159
    %v161 = vpop.f32.mrf.mxu0
    %162 = vdwg.mxu0
    %165 = vrot.lane.b32.xlu0 %v155, 120
    %v166 = vpop.permute.xlu0 %165
    %167 = vrot.lane.b32.xlu0 %v160, 120
    %v168 = vpop.permute.xlu0 %167
    %169 = vrot.lane.b32.xlu0 %v155, 112
    %v170 = vpop.permute.xlu0 %169
    %171 = vrot.lane.b32.xlu0 %v160, 112
    %v172 = vpop.permute.xlu0 %171
    %173 = vrot.lane.b32.xlu0 %v155, 104
    %v174 = vpop.permute.xlu0 %173
    %175 = vrot.lane.b32.xlu0 %v160, 104
    %v176 = vpop.permute.xlu0 %175
    %177 = vrot.lane.b32.xlu0 %v155, 96
    %v178 = vpop.permute.xlu0 %177
    %vm179 = vcmask 64512
    %v180 = vsel %vm179, %v155, 0
    %v182 = vsel %vm179, %v178, 0
    %184 = vmatprep.subr.mxu0 0.0
    %185 = vmatpush1.xpose.msra.mxu0 0.0
    %186 = vmatprep.subr.mxu0 0.0
    %187 = vmatpush1.xpose.msra.mxu0 0.0
    %188 = vmatprep.subr.mxu0 0.0
    %189 = vmatpush1.xpose.msra.mxu0 0.0
    %190 = vmatprep.subr.mxu0 0.0
    %191 = vmatpush1.xpose.msra.mxu0 0.0
    %192 = vmatprep.subr.mxu0 0.0
    %193 = vmatpush1.xpose.msra.mxu0 0.0
    %194 = vmatprep.subr.mxu0 0.0
    %195 = vmatpush1.xpose.msra.mxu0 0.0
    %196 = vmatprep.subr.mxu0 0.0
    %197 = vmatpush1.xpose.msra.mxu0 0.0
    %198 = vmatprep.subr.mxu0 0.0
    %199 = vmatpush1.xpose.msra.mxu0 0.0
    %200 = vmatprep.subr.mxu0 0.0
    %201 = vmatpush1.xpose.msra.mxu0 0.0
    %202 = vmatprep.subr.mxu0 0.0
    %203 = vmatpush1.xpose.msra.mxu0 0.0
    %204 = vmatprep.subr.mxu0 0.0
    %205 = vmatpush1.xpose.msra.mxu0 0.0
    %206 = vmatprep.subr.mxu0 0.0
    %207 = vmatpush1.xpose.msra.mxu0 0.0
    %208 = vmatprep.subr.mxu0 0.0
    %209 = vmatpush1.xpose.msra.mxu0 0.0
    %210 = vmatprep.subr.mxu0 0.0
    %211 = vmatpush1.xpose.msra.mxu0 0.0
    %212 = vmatprep.subr.mxu0 0.0
    %213 = vmatpush1.xpose.msra.mxu0 0.0
    %214 = vmatprep.subr.mxu0 0.0
    %215 = vmatpush1.xpose.msra.mxu0 %v182
    %216 = vmatprep.subr.mxu0 0.0
    %217 = vmatpush2.xpose.msra.mxu0 0.0
    %218 = vmatprep.subr.mxu0 0.0
    %219 = vmatpush2.xpose.msra.mxu0 0.0
    %220 = vmatprep.subr.mxu0 0.0
    %221 = vmatpush2.xpose.msra.mxu0 0.0
    %222 = vmatprep.subr.mxu0 0.0
    %223 = vmatpush2.xpose.msra.mxu0 0.0
    %224 = vmatprep.subr.mxu0 0.0
    %225 = vmatpush2.xpose.msra.mxu0 0.0
    %226 = vmatprep.subr.mxu0 0.0
    %227 = vmatpush2.xpose.msra.mxu0 0.0
    %228 = vmatprep.subr.mxu0 0.0
    %229 = vmatpush2.xpose.msra.mxu0 0.0
    %230 = vmatprep.subr.mxu0 0.0
    %231 = vmatpush2.xpose.msra.mxu0 0.0
    %232 = vmatprep.subr.mxu0 0.0
    %233 = vmatpush2.xpose.msra.mxu0 0.0
    %234 = vmatprep.subr.mxu0 0.0
    %235 = vmatpush2.xpose.msra.mxu0 0.0
    %236 = vmatprep.subr.mxu0 0.0
    %237 = vmatpush2.xpose.msra.mxu0 0.0
    %238 = vmatprep.subr.mxu0 0.0
    %239 = vmatpush2.xpose.msra.mxu0 0.0
    %240 = vmatprep.subr.mxu0 0.0
    %241 = vmatpush2.xpose.msra.mxu0 0.0
    %242 = vmatprep.subr.mxu0 0.0
    %243 = vmatpush2.xpose.msra.mxu0 0.0
    %244 = vmatprep.subr.mxu0 0.0
    %245 = vmatpush2.xpose.msra.mxu0 0.0
    %246 = vmatprep.subr.mxu0 0.0
    %247 = vmatpush2.xpose.msra.mxu0 0.0
    %248 = vmatprep.mubr.f32.mxu0 0.0
    %249 = vmatmul.mubr.f32.gmra.mxu0 %v180
    %v250 = vpop.f32.mrf.mxu0
    %v251 = vadd.f32 0.0, %v250
    %v252 = vpop.f32.mrf.mxu0
    %253 = vdwg.mxu0
    %254 = vrot.lane.b32.xlu0 %v166, 96
    %v255 = vpop.permute.xlu0 %254
    %v256 = vsel %vm179, %v166, 0
    %v258 = vsel %vm179, %v255, 0
    %260 = vmatprep.subr.mxu0 0.0
    %261 = vmatpush1.xpose.msra.mxu0 0.0
    %262 = vmatprep.subr.mxu0 0.0
    %263 = vmatpush1.xpose.msra.mxu0 0.0
    %264 = vmatprep.subr.mxu0 0.0
    %265 = vmatpush1.xpose.msra.mxu0 0.0
    %266 = vmatprep.subr.mxu0 0.0
    %267 = vmatpush1.xpose.msra.mxu0 0.0
    %268 = vmatprep.subr.mxu0 0.0
    %269 = vmatpush1.xpose.msra.mxu0 0.0
    %270 = vmatprep.subr.mxu0 0.0
    %271 = vmatpush1.xpose.msra.mxu0 0.0
    %272 = vmatprep.subr.mxu0 0.0
    %273 = vmatpush1.xpose.msra.mxu0 0.0
    %274 = vmatprep.subr.mxu0 0.0
    %275 = vmatpush1.xpose.msra.mxu0 0.0
    %276 = vmatprep.subr.mxu0 0.0
    %277 = vmatpush1.xpose.msra.mxu0 0.0
    %278 = vmatprep.subr.mxu0 0.0
    %279 = vmatpush1.xpose.msra.mxu0 0.0
    %280 = vmatprep.subr.mxu0 0.0
    %281 = vmatpush1.xpose.msra.mxu0 0.0
    %282 = vmatprep.subr.mxu0 0.0
    %283 = vmatpush1.xpose.msra.mxu0 0.0
    %284 = vmatprep.subr.mxu0 0.0
    %285 = vmatpush1.xpose.msra.mxu0 0.0
    %286 = vmatprep.subr.mxu0 0.0
    %287 = vmatpush1.xpose.msra.mxu0 0.0
    %288 = vmatprep.subr.mxu0 0.0
    %289 = vmatpush1.xpose.msra.mxu0 0.0
    %290 = vmatprep.subr.mxu0 0.0
    %291 = vmatpush1.xpose.msra.mxu0 %v258
    %292 = vmatprep.subr.mxu0 0.0
    %293 = vmatpush2.xpose.msra.mxu0 0.0
    %294 = vmatprep.subr.mxu0 0.0
    %295 = vmatpush2.xpose.msra.mxu0 0.0
    %296 = vmatprep.subr.mxu0 0.0
    %297 = vmatpush2.xpose.msra.mxu0 0.0
    %298 = vmatprep.subr.mxu0 0.0
    %299 = vmatpush2.xpose.msra.mxu0 0.0
    %300 = vmatprep.subr.mxu0 0.0
    %301 = vmatpush2.xpose.msra.mxu0 0.0
    %302 = vmatprep.subr.mxu0 0.0
    %303 = vmatpush2.xpose.msra.mxu0 0.0
    %304 = vmatprep.subr.mxu0 0.0
    %305 = vmatpush2.xpose.msra.mxu0 0.0
    %306 = vmatprep.subr.mxu0 0.0
    %307 = vmatpush2.xpose.msra.mxu0 0.0
    %308 = vmatprep.subr.mxu0 0.0
    %309 = vmatpush2.xpose.msra.mxu0 0.0
    %310 = vmatprep.subr.mxu0 0.0
    %311 = vmatpush2.xpose.msra.mxu0 0.0
    %312 = vmatprep.subr.mxu0 0.0
    %313 = vmatpush2.xpose.msra.mxu0 0.0
    %314 = vmatprep.subr.mxu0 0.0
    %315 = vmatpush2.xpose.msra.mxu0 0.0
    %316 = vmatprep.subr.mxu0 0.0
    %317 = vmatpush2.xpose.msra.mxu0 0.0
    %318 = vmatprep.subr.mxu0 0.0
    %319 = vmatpush2.xpose.msra.mxu0 0.0
    %320 = vmatprep.subr.mxu0 0.0
    %321 = vmatpush2.xpose.msra.mxu0 0.0
    %322 = vmatprep.subr.mxu0 0.0
    %323 = vmatpush2.xpose.msra.mxu0 0.0
    %324 = vmatprep.mubr.f32.mxu0 0.0
    %325 = vmatmul.mubr.f32.gmra.mxu0 %v256
    %v326 = vpop.f32.mrf.mxu0
    %v327 = vadd.f32 0.0, %v326
    %v328 = vpop.f32.mrf.mxu0
    %329 = vdwg.mxu0
    %330 = vrot.lane.b32.xlu0 %v170, 96
    %v331 = vpop.permute.xlu0 %330
    %v332 = vsel %vm179, %v170, 0
    %v334 = vsel %vm179, %v331, 0
    %336 = vmatprep.subr.mxu0 0.0
    %337 = vmatpush1.xpose.msra.mxu0 0.0
    %338 = vmatprep.subr.mxu0 0.0
    %339 = vmatpush1.xpose.msra.mxu0 0.0
    %340 = vmatprep.subr.mxu0 0.0
    %341 = vmatpush1.xpose.msra.mxu0 0.0
    %342 = vmatprep.subr.mxu0 0.0
    %343 = vmatpush1.xpose.msra.mxu0 0.0
    %344 = vmatprep.subr.mxu0 0.0
    %345 = vmatpush1.xpose.msra.mxu0 0.0
    %346 = vmatprep.subr.mxu0 0.0
    %347 = vmatpush1.xpose.msra.mxu0 0.0
    %348 = vmatprep.subr.mxu0 0.0
    %349 = vmatpush1.xpose.msra.mxu0 0.0
    %350 = vmatprep.subr.mxu0 0.0
    %351 = vmatpush1.xpose.msra.mxu0 0.0
    %352 = vmatprep.subr.mxu0 0.0
    %353 = vmatpush1.xpose.msra.mxu0 0.0
    %354 = vmatprep.subr.mxu0 0.0
    %355 = vmatpush1.xpose.msra.mxu0 0.0
    %356 = vmatprep.subr.mxu0 0.0
    %357 = vmatpush1.xpose.msra.mxu0 0.0
    %358 = vmatprep.subr.mxu0 0.0
    %359 = vmatpush1.xpose.msra.mxu0 0.0
    %360 = vmatprep.subr.mxu0 0.0
    %361 = vmatpush1.xpose.msra.mxu0 0.0
    %362 = vmatprep.subr.mxu0 0.0
    %363 = vmatpush1.xpose.msra.mxu0 0.0
    %364 = vmatprep.subr.mxu0 0.0
    %365 = vmatpush1.xpose.msra.mxu0 0.0
    %366 = vmatprep.subr.mxu0 0.0
    %367 = vmatpush1.xpose.msra.mxu0 %v334
    %368 = vmatprep.subr.mxu0 0.0
    %369 = vmatpush2.xpose.msra.mxu0 0.0
    %370 = vmatprep.subr.mxu0 0.0
    %371 = vmatpush2.xpose.msra.mxu0 0.0
    %372 = vmatprep.subr.mxu0 0.0
    %373 = vmatpush2.xpose.msra.mxu0 0.0
    %374 = vmatprep.subr.mxu0 0.0
    %375 = vmatpush2.xpose.msra.mxu0 0.0
    %376 = vmatprep.subr.mxu0 0.0
    %377 = vmatpush2.xpose.msra.mxu0 0.0
    %378 = vmatprep.subr.mxu0 0.0
    %379 = vmatpush2.xpose.msra.mxu0 0.0
    %380 = vmatprep.subr.mxu0 0.0
    %381 = vmatpush2.xpose.msra.mxu0 0.0
    %382 = vmatprep.subr.mxu0 0.0
    %383 = vmatpush2.xpose.msra.mxu0 0.0
    %384 = vmatprep.subr.mxu0 0.0
    %385 = vmatpush2.xpose.msra.mxu0 0.0
    %386 = vmatprep.subr.mxu0 0.0
    %387 = vmatpush2.xpose.msra.mxu0 0.0
    %388 = vmatprep.subr.mxu0 0.0
    %389 = vmatpush2.xpose.msra.mxu0 0.0
    %390 = vmatprep.subr.mxu0 0.0
    %391 = vmatpush2.xpose.msra.mxu0 0.0
    %392 = vmatprep.subr.mxu0 0.0
    %393 = vmatpush2.xpose.msra.mxu0 0.0
    %394 = vmatprep.subr.mxu0 0.0
    %395 = vmatpush2.xpose.msra.mxu0 0.0
    %396 = vmatprep.subr.mxu0 0.0
    %397 = vmatpush2.xpose.msra.mxu0 0.0
    %398 = vmatprep.subr.mxu0 0.0
    %399 = vmatpush2.xpose.msra.mxu0 0.0
    %400 = vmatprep.mubr.f32.mxu0 0.0
    %401 = vmatmul.mubr.f32.gmra.mxu0 %v332
    %v402 = vpop.f32.mrf.mxu0
    %v403 = vadd.f32 0.0, %v402
    %v404 = vpop.f32.mrf.mxu0
    %405 = vdwg.mxu0
    %406 = vrot.lane.b32.xlu0 %v174, 96
    %v407 = vpop.permute.xlu0 %406
    %v408 = vsel %vm179, %v174, 0
    %v410 = vsel %vm179, %v407, 0
    %412 = vmatprep.subr.mxu0 0.0
    %413 = vmatpush1.xpose.msra.mxu0 0.0
    %414 = vmatprep.subr.mxu0 0.0
    %415 = vmatpush1.xpose.msra.mxu0 0.0
    %416 = vmatprep.subr.mxu0 0.0
    %417 = vmatpush1.xpose.msra.mxu0 0.0
    %418 = vmatprep.subr.mxu0 0.0
    %419 = vmatpush1.xpose.msra.mxu0 0.0
    %420 = vmatprep.subr.mxu0 0.0
    %421 = vmatpush1.xpose.msra.mxu0 0.0
    %422 = vmatprep.subr.mxu0 0.0
    %423 = vmatpush1.xpose.msra.mxu0 0.0
    %424 = vmatprep.subr.mxu0 0.0
    %425 = vmatpush1.xpose.msra.mxu0 0.0
    %426 = vmatprep.subr.mxu0 0.0
    %427 = vmatpush1.xpose.msra.mxu0 0.0
    %428 = vmatprep.subr.mxu0 0.0
    %429 = vmatpush1.xpose.msra.mxu0 0.0
    %430 = vmatprep.subr.mxu0 0.0
    %431 = vmatpush1.xpose.msra.mxu0 0.0
    %432 = vmatprep.subr.mxu0 0.0
    %433 = vmatpush1.xpose.msra.mxu0 0.0
    %434 = vmatprep.subr.mxu0 0.0
    %435 = vmatpush1.xpose.msra.mxu0 0.0
    %436 = vmatprep.subr.mxu0 0.0
    %437 = vmatpush1.xpose.msra.mxu0 0.0
    %438 = vmatprep.subr.mxu0 0.0
    %439 = vmatpush1.xpose.msra.mxu0 0.0
    %440 = vmatprep.subr.mxu0 0.0
    %441 = vmatpush1.xpose.msra.mxu0 0.0
    %442 = vmatprep.subr.mxu0 0.0
    %443 = vmatpush1.xpose.msra.mxu0 %v410
    %444 = vmatprep.subr.mxu0 0.0
    %445 = vmatpush2.xpose.msra.mxu0 0.0
    %446 = vmatprep.subr.mxu0 0.0
    %447 = vmatpush2.xpose.msra.mxu0 0.0
    %448 = vmatprep.subr.mxu0 0.0
    %449 = vmatpush2.xpose.msra.mxu0 0.0
    %450 = vmatprep.subr.mxu0 0.0
    %451 = vmatpush2.xpose.msra.mxu0 0.0
    %452 = vmatprep.subr.mxu0 0.0
    %453 = vmatpush2.xpose.msra.mxu0 0.0
    %454 = vmatprep.subr.mxu0 0.0
    %455 = vmatpush2.xpose.msra.mxu0 0.0
    %456 = vmatprep.subr.mxu0 0.0
    %457 = vmatpush2.xpose.msra.mxu0 0.0
    %458 = vmatprep.subr.mxu0 0.0
    %459 = vmatpush2.xpose.msra.mxu0 0.0
    %460 = vmatprep.subr.mxu0 0.0
    %461 = vmatpush2.xpose.msra.mxu0 0.0
    %462 = vmatprep.subr.mxu0 0.0
    %463 = vmatpush2.xpose.msra.mxu0 0.0
    %464 = vmatprep.subr.mxu0 0.0
    %465 = vmatpush2.xpose.msra.mxu0 0.0
    %466 = vmatprep.subr.mxu0 0.0
    %467 = vmatpush2.xpose.msra.mxu0 0.0
    %468 = vmatprep.subr.mxu0 0.0
    %469 = vmatpush2.xpose.msra.mxu0 0.0
    %470 = vmatprep.subr.mxu0 0.0
    %471 = vmatpush2.xpose.msra.mxu0 0.0
    %472 = vmatprep.subr.mxu0 0.0
    %473 = vmatpush2.xpose.msra.mxu0 0.0
    %474 = vmatprep.subr.mxu0 0.0
    %475 = vmatpush2.xpose.msra.mxu0 0.0
    %476 = vmatprep.mubr.f32.mxu0 0.0
    %477 = vmatmul.mubr.f32.gmra.mxu0 %v408
    %v478 = vpop.f32.mrf.mxu0
    %v479 = vadd.f32 0.0, %v478
    %v480 = vpop.f32.mrf.mxu0
    %481 = vdwg.mxu0
    %482 = vrot.lane.b32.xlu0 %v160, 96
    %v483 = vpop.permute.xlu0 %482
    %v484 = vsel %vm179, %v160, 0
    %v486 = vsel %vm179, %v483, 0
    %488 = vmatprep.subr.mxu0 0.0
    %489 = vmatpush1.xpose.msra.mxu0 0.0
    %490 = vmatprep.subr.mxu0 0.0
    %491 = vmatpush1.xpose.msra.mxu0 0.0
    %492 = vmatprep.subr.mxu0 0.0
    %493 = vmatpush1.xpose.msra.mxu0 0.0
    %494 = vmatprep.subr.mxu0 0.0
    %495 = vmatpush1.xpose.msra.mxu0 0.0
    %496 = vmatprep.subr.mxu0 0.0
    %497 = vmatpush1.xpose.msra.mxu0 0.0
    %498 = vmatprep.subr.mxu0 0.0
    %499 = vmatpush1.xpose.msra.mxu0 0.0
    %500 = vmatprep.subr.mxu0 0.0
    %501 = vmatpush1.xpose.msra.mxu0 0.0
    %502 = vmatprep.subr.mxu0 0.0
    %503 = vmatpush1.xpose.msra.mxu0 0.0
    %504 = vmatprep.subr.mxu0 0.0
    %505 = vmatpush1.xpose.msra.mxu0 0.0
    %506 = vmatprep.subr.mxu0 0.0
    %507 = vmatpush1.xpose.msra.mxu0 0.0
    %508 = vmatprep.subr.mxu0 0.0
    %509 = vmatpush1.xpose.msra.mxu0 0.0
    %510 = vmatprep.subr.mxu0 0.0
    %511 = vmatpush1.xpose.msra.mxu0 0.0
    %512 = vmatprep.subr.mxu0 0.0
    %513 = vmatpush1.xpose.msra.mxu0 0.0
    %514 = vmatprep.subr.mxu0 0.0
    %515 = vmatpush1.xpose.msra.mxu0 0.0
    %516 = vmatprep.subr.mxu0 0.0
    %517 = vmatpush1.xpose.msra.mxu0 0.0
    %518 = vmatprep.subr.mxu0 0.0
    %519 = vmatpush1.xpose.msra.mxu0 %v486
    %520 = vmatprep.subr.mxu0 0.0
    %521 = vmatpush2.xpose.msra.mxu0 0.0
    %522 = vmatprep.subr.mxu0 0.0
    %523 = vmatpush2.xpose.msra.mxu0 0.0
    %524 = vmatprep.subr.mxu0 0.0
    %525 = vmatpush2.xpose.msra.mxu0 0.0
    %526 = vmatprep.subr.mxu0 0.0
    %527 = vmatpush2.xpose.msra.mxu0 0.0
    %528 = vmatprep.subr.mxu0 0.0
    %529 = vmatpush2.xpose.msra.mxu0 0.0
    %530 = vmatprep.subr.mxu0 0.0
    %531 = vmatpush2.xpose.msra.mxu0 0.0
    %532 = vmatprep.subr.mxu0 0.0
    %533 = vmatpush2.xpose.msra.mxu0 0.0
    %534 = vmatprep.subr.mxu0 0.0
    %535 = vmatpush2.xpose.msra.mxu0 0.0
    %536 = vmatprep.subr.mxu0 0.0
    %537 = vmatpush2.xpose.msra.mxu0 0.0
    %538 = vmatprep.subr.mxu0 0.0
    %539 = vmatpush2.xpose.msra.mxu0 0.0
    %540 = vmatprep.subr.mxu0 0.0
    %541 = vmatpush2.xpose.msra.mxu0 0.0
    %542 = vmatprep.subr.mxu0 0.0
    %543 = vmatpush2.xpose.msra.mxu0 0.0
    %544 = vmatprep.subr.mxu0 0.0
    %545 = vmatpush2.xpose.msra.mxu0 0.0
    %546 = vmatprep.subr.mxu0 0.0
    %547 = vmatpush2.xpose.msra.mxu0 0.0
    %548 = vmatprep.subr.mxu0 0.0
    %549 = vmatpush2.xpose.msra.mxu0 0.0
    %550 = vmatprep.subr.mxu0 0.0
    %551 = vmatpush2.xpose.msra.mxu0 0.0
    %552 = vmatprep.mubr.f32.mxu0 0.0
    %553 = vmatmul.mubr.f32.gmra.mxu0 %v484
    %v554 = vpop.f32.mrf.mxu0
    %v555 = vadd.f32 0.0, %v554
    %v556 = vpop.f32.mrf.mxu0
    %557 = vdwg.mxu0
    %558 = vrot.lane.b32.xlu0 %v168, 96
    %v559 = vpop.permute.xlu0 %558
    %v560 = vsel %vm179, %v168, 0
    %v562 = vsel %vm179, %v559, 0
    %564 = vmatprep.subr.mxu0 0.0
    %565 = vmatpush1.xpose.msra.mxu0 0.0
    %566 = vmatprep.subr.mxu0 0.0
    %567 = vmatpush1.xpose.msra.mxu0 0.0
    %568 = vmatprep.subr.mxu0 0.0
    %569 = vmatpush1.xpose.msra.mxu0 0.0
    %570 = vmatprep.subr.mxu0 0.0
    %571 = vmatpush1.xpose.msra.mxu0 0.0
    %572 = vmatprep.subr.mxu0 0.0
    %573 = vmatpush1.xpose.msra.mxu0 0.0
    %574 = vmatprep.subr.mxu0 0.0
    %575 = vmatpush1.xpose.msra.mxu0 0.0
    %576 = vmatprep.subr.mxu0 0.0
    %577 = vmatpush1.xpose.msra.mxu0 0.0
    %578 = vmatprep.subr.mxu0 0.0
    %579 = vmatpush1.xpose.msra.mxu0 0.0
    %580 = vmatprep.subr.mxu0 0.0
    %581 = vmatpush1.xpose.msra.mxu0 0.0
    %582 = vmatprep.subr.mxu0 0.0
    %583 = vmatpush1.xpose.msra.mxu0 0.0
    %584 = vmatprep.subr.mxu0 0.0
    %585 = vmatpush1.xpose.msra.mxu0 0.0
    %586 = vmatprep.subr.mxu0 0.0
    %587 = vmatpush1.xpose.msra.mxu0 0.0
    %588 = vmatprep.subr.mxu0 0.0
    %589 = vmatpush1.xpose.msra.mxu0 0.0
    %590 = vmatprep.subr.mxu0 0.0
    %591 = vmatpush1.xpose.msra.mxu0 0.0
    %592 = vmatprep.subr.mxu0 0.0
    %593 = vmatpush1.xpose.msra.mxu0 0.0
    %594 = vmatprep.subr.mxu0 0.0
    %595 = vmatpush1.xpose.msra.mxu0 %v562
    %596 = vmatprep.subr.mxu0 0.0
    %597 = vmatpush2.xpose.msra.mxu0 0.0
    %598 = vmatprep.subr.mxu0 0.0
    %599 = vmatpush2.xpose.msra.mxu0 0.0
    %600 = vmatprep.subr.mxu0 0.0
    %601 = vmatpush2.xpose.msra.mxu0 0.0
    %602 = vmatprep.subr.mxu0 0.0
    %603 = vmatpush2.xpose.msra.mxu0 0.0
    %604 = vmatprep.subr.mxu0 0.0
    %605 = vmatpush2.xpose.msra.mxu0 0.0
    %606 = vmatprep.subr.mxu0 0.0
    %607 = vmatpush2.xpose.msra.mxu0 0.0
    %608 = vmatprep.subr.mxu0 0.0
    %609 = vmatpush2.xpose.msra.mxu0 0.0
    %610 = vmatprep.subr.mxu0 0.0
    %611 = vmatpush2.xpose.msra.mxu0 0.0
    %612 = vmatprep.subr.mxu0 0.0
    %613 = vmatpush2.xpose.msra.mxu0 0.0
    %614 = vmatprep.subr.mxu0 0.0
    %615 = vmatpush2.xpose.msra.mxu0 0.0
    %616 = vmatprep.subr.mxu0 0.0
    %617 = vmatpush2.xpose.msra.mxu0 0.0
    %618 = vmatprep.subr.mxu0 0.0
    %619 = vmatpush2.xpose.msra.mxu0 0.0
    %620 = vmatprep.subr.mxu0 0.0
    %621 = vmatpush2.xpose.msra.mxu0 0.0
    %622 = vmatprep.subr.mxu0 0.0
    %623 = vmatpush2.xpose.msra.mxu0 0.0
    %624 = vmatprep.subr.mxu0 0.0
    %625 = vmatpush2.xpose.msra.mxu0 0.0
    %626 = vmatprep.subr.mxu0 0.0
    %627 = vmatpush2.xpose.msra.mxu0 0.0
    %628 = vmatprep.mubr.f32.mxu0 0.0
    %629 = vmatmul.mubr.f32.gmra.mxu0 %v560
    %v630 = vpop.f32.mrf.mxu0
    %v631 = vadd.f32 0.0, %v630
    %v632 = vpop.f32.mrf.mxu0
    %633 = vdwg.mxu0
    %634 = vrot.lane.b32.xlu0 %v172, 96
    %v635 = vpop.permute.xlu0 %634
    %v636 = vsel %vm179, %v172, 0
    %v638 = vsel %vm179, %v635, 0
    %640 = vmatprep.subr.mxu0 0.0
    %641 = vmatpush1.xpose.msra.mxu0 0.0
    %642 = vmatprep.subr.mxu0 0.0
    %643 = vmatpush1.xpose.msra.mxu0 0.0
    %644 = vmatprep.subr.mxu0 0.0
    %645 = vmatpush1.xpose.msra.mxu0 0.0
    %646 = vmatprep.subr.mxu0 0.0
    %647 = vmatpush1.xpose.msra.mxu0 0.0
    %648 = vmatprep.subr.mxu0 0.0
    %649 = vmatpush1.xpose.msra.mxu0 0.0
    %650 = vmatprep.subr.mxu0 0.0
    %651 = vmatpush1.xpose.msra.mxu0 0.0
    %652 = vmatprep.subr.mxu0 0.0
    %653 = vmatpush1.xpose.msra.mxu0 0.0
    %654 = vmatprep.subr.mxu0 0.0
    %655 = vmatpush1.xpose.msra.mxu0 0.0
    %656 = vmatprep.subr.mxu0 0.0
    %657 = vmatpush1.xpose.msra.mxu0 0.0
    %658 = vmatprep.subr.mxu0 0.0
    %659 = vmatpush1.xpose.msra.mxu0 0.0
    %660 = vmatprep.subr.mxu0 0.0
    %661 = vmatpush1.xpose.msra.mxu0 0.0
    %662 = vmatprep.subr.mxu0 0.0
    %663 = vmatpush1.xpose.msra.mxu0 0.0
    %664 = vmatprep.subr.mxu0 0.0
    %665 = vmatpush1.xpose.msra.mxu0 0.0
    %666 = vmatprep.subr.mxu0 0.0
    %667 = vmatpush1.xpose.msra.mxu0 0.0
    %668 = vmatprep.subr.mxu0 0.0
    %669 = vmatpush1.xpose.msra.mxu0 0.0
    %670 = vmatprep.subr.mxu0 0.0
    %671 = vmatpush1.xpose.msra.mxu0 %v638
    %672 = vmatprep.subr.mxu0 0.0
    %673 = vmatpush2.xpose.msra.mxu0 0.0
    %674 = vmatprep.subr.mxu0 0.0
    %675 = vmatpush2.xpose.msra.mxu0 0.0
    %676 = vmatprep.subr.mxu0 0.0
    %677 = vmatpush2.xpose.msra.mxu0 0.0
    %678 = vmatprep.subr.mxu0 0.0
    %679 = vmatpush2.xpose.msra.mxu0 0.0
    %680 = vmatprep.subr.mxu0 0.0
    %681 = vmatpush2.xpose.msra.mxu0 0.0
    %682 = vmatprep.subr.mxu0 0.0
    %683 = vmatpush2.xpose.msra.mxu0 0.0
    %684 = vmatprep.subr.mxu0 0.0
    %685 = vmatpush2.xpose.msra.mxu0 0.0
    %686 = vmatprep.subr.mxu0 0.0
    %687 = vmatpush2.xpose.msra.mxu0 0.0
    %688 = vmatprep.subr.mxu0 0.0
    %689 = vmatpush2.xpose.msra.mxu0 0.0
    %690 = vmatprep.subr.mxu0 0.0
    %691 = vmatpush2.xpose.msra.mxu0 0.0
    %692 = vmatprep.subr.mxu0 0.0
    %693 = vmatpush2.xpose.msra.mxu0 0.0
    %694 = vmatprep.subr.mxu0 0.0
    %695 = vmatpush2.xpose.msra.mxu0 0.0
    %696 = vmatprep.subr.mxu0 0.0
    %697 = vmatpush2.xpose.msra.mxu0 0.0
    %698 = vmatprep.subr.mxu0 0.0
    %699 = vmatpush2.xpose.msra.mxu0 0.0
    %700 = vmatprep.subr.mxu0 0.0
    %701 = vmatpush2.xpose.msra.mxu0 0.0
    %702 = vmatprep.subr.mxu0 0.0
    %703 = vmatpush2.xpose.msra.mxu0 0.0
    %704 = vmatprep.mubr.f32.mxu0 0.0
    %705 = vmatmul.mubr.f32.gmra.mxu0 %v636
    %v706 = vpop.f32.mrf.mxu0
    %v707 = vadd.f32 0.0, %v706
    %v708 = vpop.f32.mrf.mxu0
    %709 = vdwg.mxu0
    %710 = vrot.lane.b32.xlu0 %v176, 96
    %v711 = vpop.permute.xlu0 %710
    %v712 = vsel %vm179, %v176, 0
    %v714 = vsel %vm179, %v711, 0
    %716 = vmatprep.subr.mxu0 0.0
    %717 = vmatpush1.xpose.msra.mxu0 0.0
    %718 = vmatprep.subr.mxu0 0.0
    %719 = vmatpush1.xpose.msra.mxu0 0.0
    %720 = vmatprep.subr.mxu0 0.0
    %721 = vmatpush1.xpose.msra.mxu0 0.0
    %722 = vmatprep.subr.mxu0 0.0
    %723 = vmatpush1.xpose.msra.mxu0 0.0
    %724 = vmatprep.subr.mxu0 0.0
    %725 = vmatpush1.xpose.msra.mxu0 0.0
    %726 = vmatprep.subr.mxu0 0.0
    %727 = vmatpush1.xpose.msra.mxu0 0.0
    %728 = vmatprep.subr.mxu0 0.0
    %729 = vmatpush1.xpose.msra.mxu0 0.0
    %730 = vmatprep.subr.mxu0 0.0
    %731 = vmatpush1.xpose.msra.mxu0 0.0
    %732 = vmatprep.subr.mxu0 0.0
    %733 = vmatpush1.xpose.msra.mxu0 0.0
    %734 = vmatprep.subr.mxu0 0.0
    %735 = vmatpush1.xpose.msra.mxu0 0.0
    %736 = vmatprep.subr.mxu0 0.0
    %737 = vmatpush1.xpose.msra.mxu0 0.0
    %738 = vmatprep.subr.mxu0 0.0
    %739 = vmatpush1.xpose.msra.mxu0 0.0
    %740 = vmatprep.subr.mxu0 0.0
    %741 = vmatpush1.xpose.msra.mxu0 0.0
    %742 = vmatprep.subr.mxu0 0.0
    %743 = vmatpush1.xpose.msra.mxu0 0.0
    %744 = vmatprep.subr.mxu0 0.0
    %745 = vmatpush1.xpose.msra.mxu0 0.0
    %746 = vmatprep.subr.mxu0 0.0
    %747 = vmatpush1.xpose.msra.mxu0 %v714
    %748 = vmatprep.subr.mxu0 0.0
    %749 = vmatpush2.xpose.msra.mxu0 0.0
    %750 = vmatprep.subr.mxu0 0.0
    %751 = vmatpush2.xpose.msra.mxu0 0.0
    %752 = vmatprep.subr.mxu0 0.0
    %753 = vmatpush2.xpose.msra.mxu0 0.0
    %754 = vmatprep.subr.mxu0 0.0
    %755 = vmatpush2.xpose.msra.mxu0 0.0
    %756 = vmatprep.subr.mxu0 0.0
    %757 = vmatpush2.xpose.msra.mxu0 0.0
    %758 = vmatprep.subr.mxu0 0.0
    %759 = vmatpush2.xpose.msra.mxu0 0.0
    %760 = vmatprep.subr.mxu0 0.0
    %761 = vmatpush2.xpose.msra.mxu0 0.0
    %762 = vmatprep.subr.mxu0 0.0
    %763 = vmatpush2.xpose.msra.mxu0 0.0
    %764 = vmatprep.subr.mxu0 0.0
    %765 = vmatpush2.xpose.msra.mxu0 0.0
    %766 = vmatprep.subr.mxu0 0.0
    %767 = vmatpush2.xpose.msra.mxu0 0.0
    %768 = vmatprep.subr.mxu0 0.0
    %769 = vmatpush2.xpose.msra.mxu0 0.0
    %770 = vmatprep.subr.mxu0 0.0
    %771 = vmatpush2.xpose.msra.mxu0 0.0
    %772 = vmatprep.subr.mxu0 0.0
    %773 = vmatpush2.xpose.msra.mxu0 0.0
    %774 = vmatprep.subr.mxu0 0.0
    %775 = vmatpush2.xpose.msra.mxu0 0.0
    %776 = vmatprep.subr.mxu0 0.0
    %777 = vmatpush2.xpose.msra.mxu0 0.0
    %778 = vmatprep.subr.mxu0 0.0
    %779 = vmatpush2.xpose.msra.mxu0 0.0
    %780 = vmatprep.mubr.f32.mxu0 0.0
    %781 = vmatmul.mubr.f32.gmra.mxu0 %v712
    %v782 = vpop.f32.mrf.mxu0
    %v783 = vadd.f32 0.0, %v782
    %v784 = vpop.f32.mrf.mxu0
    %785 = vdwg.mxu0
    %v786 = vsel %vm179, %v251, -inf
    %787 = vmax.xlane.f32.xlu0 %v786
    %v788 = vpop.xlane.xlu0 %787
    %v789 = vsel %vm179, %v327, -inf
    %790 = vmax.xlane.f32.xlu0 %v789
    %v791 = vpop.xlane.xlu0 %790
    %v792 = vsel %vm179, %v403, -inf
    %793 = vmax.xlane.f32.xlu0 %v792
    %v794 = vpop.xlane.xlu0 %793
    %v795 = vsel %vm179, %v479, -inf
    %796 = vmax.xlane.f32.xlu0 %v795
    %v797 = vpop.xlane.xlu0 %796
    %v798 = vsel %vm179, %v555, -inf
    %799 = vmax.xlane.f32.xlu0 %v798
    %v800 = vpop.xlane.xlu0 %799
    %v801 = vsel %vm179, %v631, -inf
    %802 = vmax.xlane.f32.xlu0 %v801
    %v803 = vpop.xlane.xlu0 %802
    %v804 = vsel %vm179, %v707, -inf
    %805 = vmax.xlane.f32.xlu0 %v804
    %v806 = vpop.xlane.xlu0 %805
    %v807 = vsel %vm179, %v783, -inf
    %808 = vmax.xlane.f32.xlu0 %v807
    %v809 = vpop.xlane.xlu0 %808
    %v810 = vsub.f32 %v251, %v788
    %v811 = vsub.f32 %v327, %v791
    %v812 = vsub.f32 %v403, %v794
    %v813 = vsub.f32 %v479, %v797
    %v814 = vsub.f32 %v555, %v800
    %v815 = vsub.f32 %v631, %v803
    %v816 = vsub.f32 %v707, %v806
    %v817 = vsub.f32 %v783, %v809
    %v818 = vmul.f32 %v810, 1.442695
    %v819 = vpow.pop %v818
    %v820 = vmul.f32 %v811, 1.442695
    %v821 = vpow.pop %v820
    %v822 = vmul.f32 %v812, 1.442695
    %v823 = vpow.pop %v822
    %v824 = vmul.f32 %v813, 1.442695
    %v825 = vpow.pop %v824
    %v826 = vmul.f32 %v814, 1.442695
    %v827 = vpow.pop %v826
    %v828 = vmul.f32 %v815, 1.442695
    %v829 = vpow.pop %v828
    %v830 = vmul.f32 %v816, 1.442695
    %v831 = vpow.pop %v830
    %v832 = vmul.f32 %v817, 1.442695
    %v833 = vpow.pop %v832
    %v834 = vsel %vm179, %v819, 0.0
    %835 = vadd.xlane.f32.xlu0 %v834
    %v836 = vpop.xlane.xlu0 %835
    %v837 = vsel %vm179, %v821, 0.0
    %838 = vadd.xlane.f32.xlu0 %v837
    %v839 = vpop.xlane.xlu0 %838
    %v840 = vsel %vm179, %v823, 0.0
    %841 = vadd.xlane.f32.xlu0 %v840
    %v842 = vpop.xlane.xlu0 %841
    %v843 = vsel %vm179, %v825, 0.0
    %844 = vadd.xlane.f32.xlu0 %v843
    %v845 = vpop.xlane.xlu0 %844
    %v846 = vsel %vm179, %v827, 0.0
    %847 = vadd.xlane.f32.xlu0 %v846
    %v848 = vpop.xlane.xlu0 %847
    %v849 = vsel %vm179, %v829, 0.0
    %850 = vadd.xlane.f32.xlu0 %v849
    %v851 = vpop.xlane.xlu0 %850
    %v852 = vsel %vm179, %v831, 0.0
    %853 = vadd.xlane.f32.xlu0 %v852
    %v854 = vpop.xlane.xlu0 %853
    %v855 = vsel %vm179, %v833, 0.0
    %856 = vadd.xlane.f32.xlu0 %v855
    %v857 = vpop.xlane.xlu0 %856
    %v858 = vrcp.pop %v836
    %v859 = vmul.f32 %v819, %v858
    %v860 = vrcp.pop %v839
    %v861 = vmul.f32 %v821, %v860
    %v862 = vrcp.pop %v842
    %v863 = vmul.f32 %v823, %v862
    %v864 = vrcp.pop %v845
    %v865 = vmul.f32 %v825, %v864
    %v866 = vrcp.pop %v848
    %v867 = vmul.f32 %v827, %v866
    %v868 = vrcp.pop %v851
    %v869 = vmul.f32 %v829, %v868
    %v870 = vrcp.pop %v854
    %v871 = vmul.f32 %v831, %v870
    %v872 = vrcp.pop %v857
    %v873 = vmul.f32 %v833, %v872
    %874 = vrot.lane.b32.xlu0 %v155, 64
    %v875 = vpop.permute.xlu0 %874
    %v878 = vsel %vm179, %v859, 0
    %880 = vmatprep.subr.mxu0 0.0
    %881 = vmatpush1.msra.mxu0 0.0
    %882 = vmatprep.subr.mxu0 0.0
    %883 = vmatpush1.msra.mxu0 0.0
    %884 = vmatprep.subr.mxu0 0.0
    %885 = vmatpush1.msra.mxu0 0.0
    %886 = vmatprep.subr.mxu0 0.0
    %887 = vmatpush1.msra.mxu0 0.0
    %888 = vmatprep.subr.mxu0 0.0
    %889 = vmatpush1.msra.mxu0 0.0
    %890 = vmatprep.subr.mxu0 0.0
    %891 = vmatpush1.msra.mxu0 0.0
    %892 = vmatprep.subr.mxu0 0.0
    %893 = vmatpush1.msra.mxu0 0.0
    %894 = vmatprep.subr.mxu0 0.0
    %895 = vmatpush1.msra.mxu0 0.0
    %896 = vmatprep.subr.mxu0 0.0
    %897 = vmatpush1.msra.mxu0 0.0
    %898 = vmatprep.subr.mxu0 0.0
    %899 = vmatpush1.msra.mxu0 0.0
    %900 = vmatprep.subr.mxu0 0.0
    %901 = vmatpush1.msra.mxu0 0.0
    %902 = vmatprep.subr.mxu0 0.0
    %903 = vmatpush1.msra.mxu0 0.0
    %904 = vmatprep.subr.mxu0 0.0
    %905 = vmatpush1.msra.mxu0 0.0
    %906 = vmatprep.subr.mxu0 0.0
    %907 = vmatpush1.msra.mxu0 0.0
    %908 = vmatprep.subr.mxu0 0.0
    %909 = vmatpush1.msra.mxu0 0.0
    %910 = vmatprep.subr.mxu0 0.0
    %911 = vmatpush1.msra.mxu0 %v875
    %912 = vmatprep.subr.mxu0 0.0
    %913 = vmatpush2.msra.mxu0 0.0
    %914 = vmatprep.subr.mxu0 0.0
    %915 = vmatpush2.msra.mxu0 0.0
    %916 = vmatprep.subr.mxu0 0.0
    %917 = vmatpush2.msra.mxu0 0.0
    %918 = vmatprep.subr.mxu0 0.0
    %919 = vmatpush2.msra.mxu0 0.0
    %920 = vmatprep.subr.mxu0 0.0
    %921 = vmatpush2.msra.mxu0 0.0
    %922 = vmatprep.subr.mxu0 0.0
    %923 = vmatpush2.msra.mxu0 0.0
    %924 = vmatprep.subr.mxu0 0.0
    %925 = vmatpush2.msra.mxu0 0.0
    %926 = vmatprep.subr.mxu0 0.0
    %927 = vmatpush2.msra.mxu0 0.0
    %928 = vmatprep.subr.mxu0 0.0
    %929 = vmatpush2.msra.mxu0 0.0
    %930 = vmatprep.subr.mxu0 0.0
    %931 = vmatpush2.msra.mxu0 0.0
    %932 = vmatprep.subr.mxu0 0.0
    %933 = vmatpush2.msra.mxu0 0.0
    %934 = vmatprep.subr.mxu0 0.0
    %935 = vmatpush2.msra.mxu0 0.0
    %936 = vmatprep.subr.mxu0 0.0
    %937 = vmatpush2.msra.mxu0 0.0
    %938 = vmatprep.subr.mxu0 0.0
    %939 = vmatpush2.msra.mxu0 0.0
    %940 = vmatprep.subr.mxu0 0.0
    %941 = vmatpush2.msra.mxu0 0.0
    %942 = vmatprep.subr.mxu0 0.0
    %943 = vmatpush2.msra.mxu0 0.0
    %944 = vmatprep.mubr.f32.mxu0 0.0
    %945 = vmatmul.mubr.f32.gmra.mxu0 %v878
    %v946 = vpop.f32.mrf.mxu0
    %v947 = vadd.f32 0.0, %v946
    %v948 = vpop.f32.mrf.mxu0
    %949 = vdwg.mxu0
    %950 = vrot.lane.b32.xlu0 %v166, 64
    %v951 = vpop.permute.xlu0 %950
    %v954 = vsel %vm179, %v861, 0
    %956 = vmatprep.subr.mxu0 0.0
    %957 = vmatpush1.msra.mxu0 0.0
    %958 = vmatprep.subr.mxu0 0.0
    %959 = vmatpush1.msra.mxu0 0.0
    %960 = vmatprep.subr.mxu0 0.0
    %961 = vmatpush1.msra.mxu0 0.0
    %962 = vmatprep.subr.mxu0 0.0
    %963 = vmatpush1.msra.mxu0 0.0
    %964 = vmatprep.subr.mxu0 0.0
    %965 = vmatpush1.msra.mxu0 0.0
    %966 = vmatprep.subr.mxu0 0.0
    %967 = vmatpush1.msra.mxu0 0.0
    %968 = vmatprep.subr.mxu0 0.0
    %969 = vmatpush1.msra.mxu0 0.0
    %970 = vmatprep.subr.mxu0 0.0
    %971 = vmatpush1.msra.mxu0 0.0
    %972 = vmatprep.subr.mxu0 0.0
    %973 = vmatpush1.msra.mxu0 0.0
    %974 = vmatprep.subr.mxu0 0.0
    %975 = vmatpush1.msra.mxu0 0.0
    %976 = vmatprep.subr.mxu0 0.0
    %977 = vmatpush1.msra.mxu0 0.0
    %978 = vmatprep.subr.mxu0 0.0
    %979 = vmatpush1.msra.mxu0 0.0
    %980 = vmatprep.subr.mxu0 0.0
    %981 = vmatpush1.msra.mxu0 0.0
    %982 = vmatprep.subr.mxu0 0.0
    %983 = vmatpush1.msra.mxu0 0.0
    %984 = vmatprep.subr.mxu0 0.0
    %985 = vmatpush1.msra.mxu0 0.0
    %986 = vmatprep.subr.mxu0 0.0
    %987 = vmatpush1.msra.mxu0 %v951
    %988 = vmatprep.subr.mxu0 0.0
    %989 = vmatpush2.msra.mxu0 0.0
    %990 = vmatprep.subr.mxu0 0.0
    %991 = vmatpush2.msra.mxu0 0.0
    %992 = vmatprep.subr.mxu0 0.0
    %993 = vmatpush2.msra.mxu0 0.0
    %994 = vmatprep.subr.mxu0 0.0
    %995 = vmatpush2.msra.mxu0 0.0
    %996 = vmatprep.subr.mxu0 0.0
    %997 = vmatpush2.msra.mxu0 0.0
    %998 = vmatprep.subr.mxu0 0.0
    %999 = vmatpush2.msra.mxu0 0.0
    %1000 = vmatprep.subr.mxu0 0.0
    %1001 = vmatpush2.msra.mxu0 0.0
    %1002 = vmatprep.subr.mxu0 0.0
    %1003 = vmatpush2.msra.mxu0 0.0
    %1004 = vmatprep.subr.mxu0 0.0
    %1005 = vmatpush2.msra.mxu0 0.0
    %1006 = vmatprep.subr.mxu0 0.0
    %1007 = vmatpush2.msra.mxu0 0.0
    %1008 = vmatprep.subr.mxu0 0.0
    %1009 = vmatpush2.msra.mxu0 0.0
    %1010 = vmatprep.subr.mxu0 0.0
    %1011 = vmatpush2.msra.mxu0 0.0
    %1012 = vmatprep.subr.mxu0 0.0
    %1013 = vmatpush2.msra.mxu0 0.0
    %1014 = vmatprep.subr.mxu0 0.0
    %1015 = vmatpush2.msra.mxu0 0.0
    %1016 = vmatprep.subr.mxu0 0.0
    %1017 = vmatpush2.msra.mxu0 0.0
    %1018 = vmatprep.subr.mxu0 0.0
    %1019 = vmatpush2.msra.mxu0 0.0
    %1020 = vmatprep.mubr.f32.mxu0 0.0
    %1021 = vmatmul.mubr.f32.gmra.mxu0 %v954
    %v1022 = vpop.f32.mrf.mxu0
    %v1023 = vadd.f32 0.0, %v1022
    %v1024 = vpop.f32.mrf.mxu0
    %1025 = vdwg.mxu0
    %1026 = vrot.lane.b32.xlu0 %v170, 64
    %v1027 = vpop.permute.xlu0 %1026
    %v1030 = vsel %vm179, %v863, 0
    %1032 = vmatprep.subr.mxu0 0.0
    %1033 = vmatpush1.msra.mxu0 0.0
    %1034 = vmatprep.subr.mxu0 0.0
    %1035 = vmatpush1.msra.mxu0 0.0
    %1036 = vmatprep.subr.mxu0 0.0
    %1037 = vmatpush1.msra.mxu0 0.0
    %1038 = vmatprep.subr.mxu0 0.0
    %1039 = vmatpush1.msra.mxu0 0.0
    %1040 = vmatprep.subr.mxu0 0.0
    %1041 = vmatpush1.msra.mxu0 0.0
    %1042 = vmatprep.subr.mxu0 0.0
    %1043 = vmatpush1.msra.mxu0 0.0
    %1044 = vmatprep.subr.mxu0 0.0
    %1045 = vmatpush1.msra.mxu0 0.0
    %1046 = vmatprep.subr.mxu0 0.0
    %1047 = vmatpush1.msra.mxu0 0.0
    %1048 = vmatprep.subr.mxu0 0.0
    %1049 = vmatpush1.msra.mxu0 0.0
    %1050 = vmatprep.subr.mxu0 0.0
    %1051 = vmatpush1.msra.mxu0 0.0
    %1052 = vmatprep.subr.mxu0 0.0
    %1053 = vmatpush1.msra.mxu0 0.0
    %1054 = vmatprep.subr.mxu0 0.0
    %1055 = vmatpush1.msra.mxu0 0.0
    %1056 = vmatprep.subr.mxu0 0.0
    %1057 = vmatpush1.msra.mxu0 0.0
    %1058 = vmatprep.subr.mxu0 0.0
    %1059 = vmatpush1.msra.mxu0 0.0
    %1060 = vmatprep.subr.mxu0 0.0
    %1061 = vmatpush1.msra.mxu0 0.0
    %1062 = vmatprep.subr.mxu0 0.0
    %1063 = vmatpush1.msra.mxu0 %v1027
    %1064 = vmatprep.subr.mxu0 0.0
    %1065 = vmatpush2.msra.mxu0 0.0
    %1066 = vmatprep.subr.mxu0 0.0
    %1067 = vmatpush2.msra.mxu0 0.0
    %1068 = vmatprep.subr.mxu0 0.0
    %1069 = vmatpush2.msra.mxu0 0.0
    %1070 = vmatprep.subr.mxu0 0.0
    %1071 = vmatpush2.msra.mxu0 0.0
    %1072 = vmatprep.subr.mxu0 0.0
    %1073 = vmatpush2.msra.mxu0 0.0
    %1074 = vmatprep.subr.mxu0 0.0
    %1075 = vmatpush2.msra.mxu0 0.0
    %1076 = vmatprep.subr.mxu0 0.0
    %1077 = vmatpush2.msra.mxu0 0.0
    %1078 = vmatprep.subr.mxu0 0.0
    %1079 = vmatpush2.msra.mxu0 0.0
    %1080 = vmatprep.subr.mxu0 0.0
    %1081 = vmatpush2.msra.mxu0 0.0
    %1082 = vmatprep.subr.mxu0 0.0
    %1083 = vmatpush2.msra.mxu0 0.0
    %1084 = vmatprep.subr.mxu0 0.0
    %1085 = vmatpush2.msra.mxu0 0.0
    %1086 = vmatprep.subr.mxu0 0.0
    %1087 = vmatpush2.msra.mxu0 0.0
    %1088 = vmatprep.subr.mxu0 0.0
    %1089 = vmatpush2.msra.mxu0 0.0
    %1090 = vmatprep.subr.mxu0 0.0
    %1091 = vmatpush2.msra.mxu0 0.0
    %1092 = vmatprep.subr.mxu0 0.0
    %1093 = vmatpush2.msra.mxu0 0.0
    %1094 = vmatprep.subr.mxu0 0.0
    %1095 = vmatpush2.msra.mxu0 0.0
    %1096 = vmatprep.mubr.f32.mxu0 0.0
    %1097 = vmatmul.mubr.f32.gmra.mxu0 %v1030
    %v1098 = vpop.f32.mrf.mxu0
    %v1099 = vadd.f32 0.0, %v1098
    %v1100 = vpop.f32.mrf.mxu0
    %1101 = vdwg.mxu0
    %1102 = vrot.lane.b32.xlu0 %v174, 64
    %v1103 = vpop.permute.xlu0 %1102
    %v1106 = vsel %vm179, %v865, 0
    %1108 = vmatprep.subr.mxu0 0.0
    %1109 = vmatpush1.msra.mxu0 0.0
    %1110 = vmatprep.subr.mxu0 0.0
    %1111 = vmatpush1.msra.mxu0 0.0
    %1112 = vmatprep.subr.mxu0 0.0
    %1113 = vmatpush1.msra.mxu0 0.0
    %1114 = vmatprep.subr.mxu0 0.0
    %1115 = vmatpush1.msra.mxu0 0.0
    %1116 = vmatprep.subr.mxu0 0.0
    %1117 = vmatpush1.msra.mxu0 0.0
    %1118 = vmatprep.subr.mxu0 0.0
    %1119 = vmatpush1.msra.mxu0 0.0
    %1120 = vmatprep.subr.mxu0 0.0
    %1121 = vmatpush1.msra.mxu0 0.0
    %1122 = vmatprep.subr.mxu0 0.0
    %1123 = vmatpush1.msra.mxu0 0.0
    %1124 = vmatprep.subr.mxu0 0.0
    %1125 = vmatpush1.msra.mxu0 0.0
    %1126 = vmatprep.subr.mxu0 0.0
    %1127 = vmatpush1.msra.mxu0 0.0
    %1128 = vmatprep.subr.mxu0 0.0
    %1129 = vmatpush1.msra.mxu0 0.0
    %1130 = vmatprep.subr.mxu0 0.0
    %1131 = vmatpush1.msra.mxu0 0.0
    %1132 = vmatprep.subr.mxu0 0.0
    %1133 = vmatpush1.msra.mxu0 0.0
    %1134 = vmatprep.subr.mxu0 0.0
    %1135 = vmatpush1.msra.mxu0 0.0
    %1136 = vmatprep.subr.mxu0 0.0
    %1137 = vmatpush1.msra.mxu0 0.0
    %1138 = vmatprep.subr.mxu0 0.0
    %1139 = vmatpush1.msra.mxu0 %v1103
    %1140 = vmatprep.subr.mxu0 0.0
    %1141 = vmatpush2.msra.mxu0 0.0
    %1142 = vmatprep.subr.mxu0 0.0
    %1143 = vmatpush2.msra.mxu0 0.0
    %1144 = vmatprep.subr.mxu0 0.0
    %1145 = vmatpush2.msra.mxu0 0.0
    %1146 = vmatprep.subr.mxu0 0.0
    %1147 = vmatpush2.msra.mxu0 0.0
    %1148 = vmatprep.subr.mxu0 0.0
    %1149 = vmatpush2.msra.mxu0 0.0
    %1150 = vmatprep.subr.mxu0 0.0
    %1151 = vmatpush2.msra.mxu0 0.0
    %1152 = vmatprep.subr.mxu0 0.0
    %1153 = vmatpush2.msra.mxu0 0.0
    %1154 = vmatprep.subr.mxu0 0.0
    %1155 = vmatpush2.msra.mxu0 0.0
    %1156 = vmatprep.subr.mxu0 0.0
    %1157 = vmatpush2.msra.mxu0 0.0
    %1158 = vmatprep.subr.mxu0 0.0
    %1159 = vmatpush2.msra.mxu0 0.0
    %1160 = vmatprep.subr.mxu0 0.0
    %1161 = vmatpush2.msra.mxu0 0.0
    %1162 = vmatprep.subr.mxu0 0.0
    %1163 = vmatpush2.msra.mxu0 0.0
    %1164 = vmatprep.subr.mxu0 0.0
    %1165 = vmatpush2.msra.mxu0 0.0
    %1166 = vmatprep.subr.mxu0 0.0
    %1167 = vmatpush2.msra.mxu0 0.0
    %1168 = vmatprep.subr.mxu0 0.0
    %1169 = vmatpush2.msra.mxu0 0.0
    %1170 = vmatprep.subr.mxu0 0.0
    %1171 = vmatpush2.msra.mxu0 0.0
    %1172 = vmatprep.mubr.f32.mxu0 0.0
    %1173 = vmatmul.mubr.f32.gmra.mxu0 %v1106
    %v1174 = vpop.f32.mrf.mxu0
    %v1175 = vadd.f32 0.0, %v1174
    %v1176 = vpop.f32.mrf.mxu0
    %1177 = vdwg.mxu0
    %1178 = vrot.lane.b32.xlu0 %v160, 64
    %v1179 = vpop.permute.xlu0 %1178
    %v1182 = vsel %vm179, %v867, 0
    %1184 = vmatprep.subr.mxu0 0.0
    %1185 = vmatpush1.msra.mxu0 0.0
    %1186 = vmatprep.subr.mxu0 0.0
    %1187 = vmatpush1.msra.mxu0 0.0
    %1188 = vmatprep.subr.mxu0 0.0
    %1189 = vmatpush1.msra.mxu0 0.0
    %1190 = vmatprep.subr.mxu0 0.0
    %1191 = vmatpush1.msra.mxu0 0.0
    %1192 = vmatprep.subr.mxu0 0.0
    %1193 = vmatpush1.msra.mxu0 0.0
    %1194 = vmatprep.subr.mxu0 0.0
    %1195 = vmatpush1.msra.mxu0 0.0
    %1196 = vmatprep.subr.mxu0 0.0
    %1197 = vmatpush1.msra.mxu0 0.0
    %1198 = vmatprep.subr.mxu0 0.0
    %1199 = vmatpush1.msra.mxu0 0.0
    %1200 = vmatprep.subr.mxu0 0.0
    %1201 = vmatpush1.msra.mxu0 0.0
    %1202 = vmatprep.subr.mxu0 0.0
    %1203 = vmatpush1.msra.mxu0 0.0
    %1204 = vmatprep.subr.mxu0 0.0
    %1205 = vmatpush1.msra.mxu0 0.0
    %1206 = vmatprep.subr.mxu0 0.0
    %1207 = vmatpush1.msra.mxu0 0.0
    %1208 = vmatprep.subr.mxu0 0.0
    %1209 = vmatpush1.msra.mxu0 0.0
    %1210 = vmatprep.subr.mxu0 0.0
    %1211 = vmatpush1.msra.mxu0 0.0
    %1212 = vmatprep.subr.mxu0 0.0
    %1213 = vmatpush1.msra.mxu0 0.0
    %1214 = vmatprep.subr.mxu0 0.0
    %1215 = vmatpush1.msra.mxu0 %v1179
    %1216 = vmatprep.subr.mxu0 0.0
    %1217 = vmatpush2.msra.mxu0 0.0
    %1218 = vmatprep.subr.mxu0 0.0
    %1219 = vmatpush2.msra.mxu0 0.0
    %1220 = vmatprep.subr.mxu0 0.0
    %1221 = vmatpush2.msra.mxu0 0.0
    %1222 = vmatprep.subr.mxu0 0.0
    %1223 = vmatpush2.msra.mxu0 0.0
    %1224 = vmatprep.subr.mxu0 0.0
    %1225 = vmatpush2.msra.mxu0 0.0
    %1226 = vmatprep.subr.mxu0 0.0
    %1227 = vmatpush2.msra.mxu0 0.0
    %1228 = vmatprep.subr.mxu0 0.0
    %1229 = vmatpush2.msra.mxu0 0.0
    %1230 = vmatprep.subr.mxu0 0.0
    %1231 = vmatpush2.msra.mxu0 0.0
    %1232 = vmatprep.subr.mxu0 0.0
    %1233 = vmatpush2.msra.mxu0 0.0
    %1234 = vmatprep.subr.mxu0 0.0
    %1235 = vmatpush2.msra.mxu0 0.0
    %1236 = vmatprep.subr.mxu0 0.0
    %1237 = vmatpush2.msra.mxu0 0.0
    %1238 = vmatprep.subr.mxu0 0.0
    %1239 = vmatpush2.msra.mxu0 0.0
    %1240 = vmatprep.subr.mxu0 0.0
    %1241 = vmatpush2.msra.mxu0 0.0
    %1242 = vmatprep.subr.mxu0 0.0
    %1243 = vmatpush2.msra.mxu0 0.0
    %1244 = vmatprep.subr.mxu0 0.0
    %1245 = vmatpush2.msra.mxu0 0.0
    %1246 = vmatprep.subr.mxu0 0.0
    %1247 = vmatpush2.msra.mxu0 0.0
    %1248 = vmatprep.mubr.f32.mxu0 0.0
    %1249 = vmatmul.mubr.f32.gmra.mxu0 %v1182
    %v1250 = vpop.f32.mrf.mxu0
    %v1251 = vadd.f32 0.0, %v1250
    %v1252 = vpop.f32.mrf.mxu0
    %1253 = vdwg.mxu0
    %1254 = vrot.lane.b32.xlu0 %v168, 64
    %v1255 = vpop.permute.xlu0 %1254
    %v1258 = vsel %vm179, %v869, 0
    %1260 = vmatprep.subr.mxu0 0.0
    %1261 = vmatpush1.msra.mxu0 0.0
    %1262 = vmatprep.subr.mxu0 0.0
    %1263 = vmatpush1.msra.mxu0 0.0
    %1264 = vmatprep.subr.mxu0 0.0
    %1265 = vmatpush1.msra.mxu0 0.0
    %1266 = vmatprep.subr.mxu0 0.0
    %1267 = vmatpush1.msra.mxu0 0.0
    %1268 = vmatprep.subr.mxu0 0.0
    %1269 = vmatpush1.msra.mxu0 0.0
    %1270 = vmatprep.subr.mxu0 0.0
    %1271 = vmatpush1.msra.mxu0 0.0
    %1272 = vmatprep.subr.mxu0 0.0
    %1273 = vmatpush1.msra.mxu0 0.0
    %1274 = vmatprep.subr.mxu0 0.0
    %1275 = vmatpush1.msra.mxu0 0.0
    %1276 = vmatprep.subr.mxu0 0.0
    %1277 = vmatpush1.msra.mxu0 0.0
    %1278 = vmatprep.subr.mxu0 0.0
    %1279 = vmatpush1.msra.mxu0 0.0
    %1280 = vmatprep.subr.mxu0 0.0
    %1281 = vmatpush1.msra.mxu0 0.0
    %1282 = vmatprep.subr.mxu0 0.0
    %1283 = vmatpush1.msra.mxu0 0.0
    %1284 = vmatprep.subr.mxu0 0.0
    %1285 = vmatpush1.msra.mxu0 0.0
    %1286 = vmatprep.subr.mxu0 0.0
    %1287 = vmatpush1.msra.mxu0 0.0
    %1288 = vmatprep.subr.mxu0 0.0
    %1289 = vmatpush1.msra.mxu0 0.0
    %1290 = vmatprep.subr.mxu0 0.0
    %1291 = vmatpush1.msra.mxu0 %v1255
    %1292 = vmatprep.subr.mxu0 0.0
    %1293 = vmatpush2.msra.mxu0 0.0
    %1294 = vmatprep.subr.mxu0 0.0
    %1295 = vmatpush2.msra.mxu0 0.0
    %1296 = vmatprep.subr.mxu0 0.0
    %1297 = vmatpush2.msra.mxu0 0.0
    %1298 = vmatprep.subr.mxu0 0.0
    %1299 = vmatpush2.msra.mxu0 0.0
    %1300 = vmatprep.subr.mxu0 0.0
    %1301 = vmatpush2.msra.mxu0 0.0
    %1302 = vmatprep.subr.mxu0 0.0
    %1303 = vmatpush2.msra.mxu0 0.0
    %1304 = vmatprep.subr.mxu0 0.0
    %1305 = vmatpush2.msra.mxu0 0.0
    %1306 = vmatprep.subr.mxu0 0.0
    %1307 = vmatpush2.msra.mxu0 0.0
    %1308 = vmatprep.subr.mxu0 0.0
    %1309 = vmatpush2.msra.mxu0 0.0
    %1310 = vmatprep.subr.mxu0 0.0
    %1311 = vmatpush2.msra.mxu0 0.0
    %1312 = vmatprep.subr.mxu0 0.0
    %1313 = vmatpush2.msra.mxu0 0.0
    %1314 = vmatprep.subr.mxu0 0.0
    %1315 = vmatpush2.msra.mxu0 0.0
    %1316 = vmatprep.subr.mxu0 0.0
    %1317 = vmatpush2.msra.mxu0 0.0
    %1318 = vmatprep.subr.mxu0 0.0
    %1319 = vmatpush2.msra.mxu0 0.0
    %1320 = vmatprep.subr.mxu0 0.0
    %1321 = vmatpush2.msra.mxu0 0.0
    %1322 = vmatprep.subr.mxu0 0.0
    %1323 = vmatpush2.msra.mxu0 0.0
    %1324 = vmatprep.mubr.f32.mxu0 0.0
    %1325 = vmatmul.mubr.f32.gmra.mxu0 %v1258
    %v1326 = vpop.f32.mrf.mxu0
    %v1327 = vadd.f32 0.0, %v1326
    %v1328 = vpop.f32.mrf.mxu0
    %1329 = vdwg.mxu0
    %1330 = vrot.lane.b32.xlu0 %v172, 64
    %v1331 = vpop.permute.xlu0 %1330
    %v1334 = vsel %vm179, %v871, 0
    %1336 = vmatprep.subr.mxu0 0.0
    %1337 = vmatpush1.msra.mxu0 0.0
    %1338 = vmatprep.subr.mxu0 0.0
    %1339 = vmatpush1.msra.mxu0 0.0
    %1340 = vmatprep.subr.mxu0 0.0
    %1341 = vmatpush1.msra.mxu0 0.0
    %1342 = vmatprep.subr.mxu0 0.0
    %1343 = vmatpush1.msra.mxu0 0.0
    %1344 = vmatprep.subr.mxu0 0.0
    %1345 = vmatpush1.msra.mxu0 0.0
    %1346 = vmatprep.subr.mxu0 0.0
    %1347 = vmatpush1.msra.mxu0 0.0
    %1348 = vmatprep.subr.mxu0 0.0
    %1349 = vmatpush1.msra.mxu0 0.0
    %1350 = vmatprep.subr.mxu0 0.0
    %1351 = vmatpush1.msra.mxu0 0.0
    %1352 = vmatprep.subr.mxu0 0.0
    %1353 = vmatpush1.msra.mxu0 0.0
    %1354 = vmatprep.subr.mxu0 0.0
    %1355 = vmatpush1.msra.mxu0 0.0
    %1356 = vmatprep.subr.mxu0 0.0
    %1357 = vmatpush1.msra.mxu0 0.0
    %1358 = vmatprep.subr.mxu0 0.0
    %1359 = vmatpush1.msra.mxu0 0.0
    %1360 = vmatprep.subr.mxu0 0.0
    %1361 = vmatpush1.msra.mxu0 0.0
    %1362 = vmatprep.subr.mxu0 0.0
    %1363 = vmatpush1.msra.mxu0 0.0
    %1364 = vmatprep.subr.mxu0 0.0
    %1365 = vmatpush1.msra.mxu0 0.0
    %1366 = vmatprep.subr.mxu0 0.0
    %1367 = vmatpush1.msra.mxu0 %v1331
    %1368 = vmatprep.subr.mxu0 0.0
    %1369 = vmatpush2.msra.mxu0 0.0
    %1370 = vmatprep.subr.mxu0 0.0
    %1371 = vmatpush2.msra.mxu0 0.0
    %1372 = vmatprep.subr.mxu0 0.0
    %1373 = vmatpush2.msra.mxu0 0.0
    %1374 = vmatprep.subr.mxu0 0.0
    %1375 = vmatpush2.msra.mxu0 0.0
    %1376 = vmatprep.subr.mxu0 0.0
    %1377 = vmatpush2.msra.mxu0 0.0
    %1378 = vmatprep.subr.mxu0 0.0
    %1379 = vmatpush2.msra.mxu0 0.0
    %1380 = vmatprep.subr.mxu0 0.0
    %1381 = vmatpush2.msra.mxu0 0.0
    %1382 = vmatprep.subr.mxu0 0.0
    %1383 = vmatpush2.msra.mxu0 0.0
    %1384 = vmatprep.subr.mxu0 0.0
    %1385 = vmatpush2.msra.mxu0 0.0
    %1386 = vmatprep.subr.mxu0 0.0
    %1387 = vmatpush2.msra.mxu0 0.0
    %1388 = vmatprep.subr.mxu0 0.0
    %1389 = vmatpush2.msra.mxu0 0.0
    %1390 = vmatprep.subr.mxu0 0.0
    %1391 = vmatpush2.msra.mxu0 0.0
    %1392 = vmatprep.subr.mxu0 0.0
    %1393 = vmatpush2.msra.mxu0 0.0
    %1394 = vmatprep.subr.mxu0 0.0
    %1395 = vmatpush2.msra.mxu0 0.0
    %1396 = vmatprep.subr.mxu0 0.0
    %1397 = vmatpush2.msra.mxu0 0.0
    %1398 = vmatprep.subr.mxu0 0.0
    %1399 = vmatpush2.msra.mxu0 0.0
    %1400 = vmatprep.mubr.f32.mxu0 0.0
    %1401 = vmatmul.mubr.f32.gmra.mxu0 %v1334
    %v1402 = vpop.f32.mrf.mxu0
    %v1403 = vadd.f32 0.0, %v1402
    %v1404 = vpop.f32.mrf.mxu0
    %1405 = vdwg.mxu0
    %1406 = vrot.lane.b32.xlu0 %v176, 64
    %v1407 = vpop.permute.xlu0 %1406
    %v1410 = vsel %vm179, %v873, 0
    %1412 = vmatprep.subr.mxu0 0.0
    %1413 = vmatpush1.msra.mxu0 0.0
    %1414 = vmatprep.subr.mxu0 0.0
    %1415 = vmatpush1.msra.mxu0 0.0
    %1416 = vmatprep.subr.mxu0 0.0
    %1417 = vmatpush1.msra.mxu0 0.0
    %1418 = vmatprep.subr.mxu0 0.0
    %1419 = vmatpush1.msra.mxu0 0.0
    %1420 = vmatprep.subr.mxu0 0.0
    %1421 = vmatpush1.msra.mxu0 0.0
    %1422 = vmatprep.subr.mxu0 0.0
    %1423 = vmatpush1.msra.mxu0 0.0
    %1424 = vmatprep.subr.mxu0 0.0
    %1425 = vmatpush1.msra.mxu0 0.0
    %1426 = vmatprep.subr.mxu0 0.0
    %1427 = vmatpush1.msra.mxu0 0.0
    %1428 = vmatprep.subr.mxu0 0.0
    %1429 = vmatpush1.msra.mxu0 0.0
    %1430 = vmatprep.subr.mxu0 0.0
    %1431 = vmatpush1.msra.mxu0 0.0
    %1432 = vmatprep.subr.mxu0 0.0
    %1433 = vmatpush1.msra.mxu0 0.0
    %1434 = vmatprep.subr.mxu0 0.0
    %1435 = vmatpush1.msra.mxu0 0.0
    %1436 = vmatprep.subr.mxu0 0.0
    %1437 = vmatpush1.msra.mxu0 0.0
    %1438 = vmatprep.subr.mxu0 0.0
    %1439 = vmatpush1.msra.mxu0 0.0
    %1440 = vmatprep.subr.mxu0 0.0
    %1441 = vmatpush1.msra.mxu0 0.0
    %1442 = vmatprep.subr.mxu0 0.0
    %1443 = vmatpush1.msra.mxu0 %v1407
    %1444 = vmatprep.subr.mxu0 0.0
    %1445 = vmatpush2.msra.mxu0 0.0
    %1446 = vmatprep.subr.mxu0 0.0
    %1447 = vmatpush2.msra.mxu0 0.0
    %1448 = vmatprep.subr.mxu0 0.0
    %1449 = vmatpush2.msra.mxu0 0.0
    %1450 = vmatprep.subr.mxu0 0.0
    %1451 = vmatpush2.msra.mxu0 0.0
    %1452 = vmatprep.subr.mxu0 0.0
    %1453 = vmatpush2.msra.mxu0 0.0
    %1454 = vmatprep.subr.mxu0 0.0
    %1455 = vmatpush2.msra.mxu0 0.0
    %1456 = vmatprep.subr.mxu0 0.0
    %1457 = vmatpush2.msra.mxu0 0.0
    %1458 = vmatprep.subr.mxu0 0.0
    %1459 = vmatpush2.msra.mxu0 0.0
    %1460 = vmatprep.subr.mxu0 0.0
    %1461 = vmatpush2.msra.mxu0 0.0
    %1462 = vmatprep.subr.mxu0 0.0
    %1463 = vmatpush2.msra.mxu0 0.0
    %1464 = vmatprep.subr.mxu0 0.0
    %1465 = vmatpush2.msra.mxu0 0.0
    %1466 = vmatprep.subr.mxu0 0.0
    %1467 = vmatpush2.msra.mxu0 0.0
    %1468 = vmatprep.subr.mxu0 0.0
    %1469 = vmatpush2.msra.mxu0 0.0
    %1470 = vmatprep.subr.mxu0 0.0
    %1471 = vmatpush2.msra.mxu0 0.0
    %1472 = vmatprep.subr.mxu0 0.0
    %1473 = vmatpush2.msra.mxu0 0.0
    %1474 = vmatprep.subr.mxu0 0.0
    %1475 = vmatpush2.msra.mxu0 0.0
    %1476 = vmatprep.mubr.f32.mxu0 0.0
    %1477 = vmatmul.mubr.f32.gmra.mxu0 %v1410
    %v1478 = vpop.f32.mrf.mxu0
    %v1479 = vadd.f32 0.0, %v1478
    %v1480 = vpop.f32.mrf.mxu0
    %1481 = vdwg.mxu0
    %1484 = vrot.lane.b32.xlu0 %v1023, 8
    %v1485 = vpop.permute.xlu0 %1484
    %1486 = vrot.lane.b32.xlu0 %v1327, 8
    %v1487 = vpop.permute.xlu0 %1486
    %1492 = vrot.lane.b32.xlu0 %v1099, 16
    %v1493 = vpop.permute.xlu0 %1492
    %1494 = vrot.lane.b32.xlu0 %v1403, 16
    %v1495 = vpop.permute.xlu0 %1494
    %1500 = vrot.lane.b32.xlu0 %v1175, 24
    %v1501 = vpop.permute.xlu0 %1500
    %1502 = vrot.lane.b32.xlu0 %v1479, 24
    %v1503 = vpop.permute.xlu0 %1502
    %v1506 = vsel %vm179, %v947, %v1485
    %v1507 = vsel %vm179, %v1251, %v1487
    %vm1508 = vcmask 130048
    %v1509 = vsel %vm1508, %v1506, %v1493
    %v1510 = vsel %vm1508, %v1507, %v1495
    %vm1511 = vcmask 195584
    %v1512 = vsel %vm1511, %v1509, %v1501
    %v1513 = vsel %vm1511, %v1510, %v1503
    %v1514 = vld [vmem:[#allocation7] sm:$0xff]
    %v1515 = vld [vmem:[#allocation7 + $0x8] sm:$0xff]
    %v1516 = vld [vmem:[#allocation7 + $0x10] sm:$0xff]
    %v1517 = vld [vmem:[#allocation7 + $0x18] sm:$0xff]
    %v1518 = vld [vmem:[%s4] sm:$0x1]
    %v1520 = vlaneseq
    %v1521 = vshrl.u32 %v1520, 7
    %v1522 = vsub.s32 0, %v1521
    %v1523 = vrot.slane %v1518, %v1522
    %v1526 = vsel %vm81, %v1512, 0
    %v1529 = vsel %vm81, %v1513, 0
    %1531 = vmatprep.subr.mxu0 0.0
    %1532 = vmatpush1.msra.mxu0 0.0
    %1533 = vmatprep.subr.mxu0 0.0
    %1534 = vmatpush1.msra.mxu0 0.0
    %1535 = vmatprep.subr.mxu0 0.0
    %1536 = vmatpush1.msra.mxu0 0.0
    %1537 = vmatprep.subr.mxu0 0.0
    %1538 = vmatpush1.msra.mxu0 0.0
    %1539 = vmatprep.subr.mxu0 0.0
    %1540 = vmatpush1.msra.mxu0 0.0
    %1541 = vmatprep.subr.mxu0 0.0
    %1542 = vmatpush1.msra.mxu0 0.0
    %1543 = vmatprep.subr.mxu0 0.0
    %1544 = vmatpush1.msra.mxu0 0.0
    %1545 = vmatprep.subr.mxu0 0.0
    %1546 = vmatpush1.msra.mxu0 0.0
    %1547 = vmatprep.subr.mxu0 0.0
    %1548 = vmatpush1.msra.mxu0 0.0
    %1549 = vmatprep.subr.mxu0 0.0
    %1550 = vmatpush1.msra.mxu0 0.0
    %1551 = vmatprep.subr.mxu0 0.0
    %1552 = vmatpush1.msra.mxu0 0.0
    %1553 = vmatprep.subr.mxu0 0.0
    %1554 = vmatpush1.msra.mxu0 0.0
    %1555 = vmatprep.subr.mxu0 0.0
    %1556 = vmatpush1.msra.mxu0 %v1517
    %1557 = vmatprep.subr.mxu0 0.0
    %1558 = vmatpush1.msra.mxu0 %v1516
    %1559 = vmatprep.subr.mxu0 0.0
    %1560 = vmatpush1.msra.mxu0 %v1515
    %1561 = vmatprep.subr.mxu0 0.0
    %1562 = vmatpush1.msra.mxu0 %v1514
    %1563 = vmatprep.subr.mxu0 0.0
    %1564 = vmatpush2.msra.mxu0 0.0
    %1565 = vmatprep.subr.mxu0 0.0
    %1566 = vmatpush2.msra.mxu0 0.0
    %1567 = vmatprep.subr.mxu0 0.0
    %1568 = vmatpush2.msra.mxu0 0.0
    %1569 = vmatprep.subr.mxu0 0.0
    %1570 = vmatpush2.msra.mxu0 0.0
    %1571 = vmatprep.subr.mxu0 0.0
    %1572 = vmatpush2.msra.mxu0 0.0
    %1573 = vmatprep.subr.mxu0 0.0
    %1574 = vmatpush2.msra.mxu0 0.0
    %1575 = vmatprep.subr.mxu0 0.0
    %1576 = vmatpush2.msra.mxu0 0.0
    %1577 = vmatprep.subr.mxu0 0.0
    %1578 = vmatpush2.msra.mxu0 0.0
    %1579 = vmatprep.subr.mxu0 0.0
    %1580 = vmatpush2.msra.mxu0 0.0
    %1581 = vmatprep.subr.mxu0 0.0
    %1582 = vmatpush2.msra.mxu0 0.0
    %1583 = vmatprep.subr.mxu0 0.0
    %1584 = vmatpush2.msra.mxu0 0.0
    %1585 = vmatprep.subr.mxu0 0.0
    %1586 = vmatpush2.msra.mxu0 0.0
    %1587 = vmatprep.subr.mxu0 0.0
    %1588 = vmatpush2.msra.mxu0 0.0
    %1589 = vmatprep.subr.mxu0 0.0
    %1590 = vmatpush2.msra.mxu0 0.0
    %1591 = vmatprep.subr.mxu0 0.0
    %1592 = vmatpush2.msra.mxu0 0.0
    %1593 = vmatprep.subr.mxu0 0.0
    %1594 = vmatpush2.msra.mxu0 0.0
    %1595 = vmatprep.mubr.f32.mxu0 0.0
    %1596 = vmatmul.mubr.f32.gmra.mxu0 %v1526
    %v1597 = vpop.f32.mrf.mxu0
    %v1598 = vadd.f32 %v1523, %v1597
    %v1599 = vpop.f32.mrf.mxu0
    %1600 = vmatprep.mubr.f32.mxu0 0.0
    %1601 = vmatmul.mubr.f32.gmra.mxu0 %v1529
    %v1602 = vpop.f32.mrf.mxu0
    %v1603 = vadd.f32 %v1523, %v1602
    %v1604 = vpop.f32.mrf.mxu0
    %1605 = vdwg.mxu0
    %v1606 = vadd.f32 %v68, %v1598
    %v1607 = vadd.f32 %v69, %v1603
    %v1608 = vsel %vm81, %v1606, 0.0
    %1609 = vadd.xlane.f32.xlu0 %v1608
    %v1610 = vpop.xlane.xlu0 %1609
    %v1611 = vsel %vm81, %v1607, 0.0
    %1612 = vadd.xlane.f32.xlu0 %v1611
    %v1613 = vpop.xlane.xlu0 %1612
    %v1614 = vrcp.pop 32.0
    %v1615 = vmul.f32 %v1610, %v1614
    %v1616 = vmul.f32 %v1613, %v1614
    %v1617 = vsub.f32 %v1606, %v1615
    %v1618 = vsub.f32 %v1607, %v1616
    %v1619 = vmul.f32 %v1617, %v1617
    %v1620 = vmul.f32 %v1618, %v1618
    %v1621 = vsel %vm81, %v1619, 0.0
    %1622 = vadd.xlane.f32.xlu0 %v1621
    %v1623 = vpop.xlane.xlu0 %1622
    %v1624 = vsel %vm81, %v1620, 0.0
    %1625 = vadd.xlane.f32.xlu0 %v1624
    %v1626 = vpop.xlane.xlu0 %1625
    %v1627 = vmul.f32 %v1623, %v1614
    %v1628 = vmul.f32 %v1626, %v1614
    %v1629 = vadd.f32 %v1627, 1e-05
    %v1630 = vadd.f32 %v1628, 1e-05
    %v1631 = vrsqrt.pop %v1629
    %v1632 = vrsqrt.pop %v1630
    %v1633 = vmul.f32 %v1617, %v1631
    %v1634 = vmul.f32 %v1618, %v1632
    %v1635 = vld [vmem:[%s5] sm:$0x1]
    %v1637 = vlaneseq
    %v1638 = vshrl.u32 %v1637, 7
    %v1639 = vsub.s32 0, %v1638
    %v1640 = vrot.slane %v1635, %v1639
    %v1642 = vmul.f32 %v1633, %v1640
    %v1643 = vmul.f32 %v1634, %v1640
    %v1644 = vld [vmem:[%s6] sm:$0x1]
    %v1646 = vlaneseq
    %v1647 = vshrl.u32 %v1646, 7
    %v1648 = vsub.s32 0, %v1647
    %v1649 = vrot.slane %v1644, %v1648
    %v1651 = vadd.f32 %v1642, %v1649
    %v1652 = vadd.f32 %v1643, %v1649
    %1653 = vst.msk [vmem:[#allocation8] sm:$0xff] %vm81, %v1651
    %1654 = vst.msk [vmem:[#allocation8 + $0x8] sm:$0xff] %vm81, %v1652
    // Predicated region
    $region42: #{tpu_custom_call.1} parent=1 // pred_check
      _
    $region43: #{tpu_custom_call.1} parent=1 // pred_check_branch
      %1656 = sbr.rel (0) target = $region45
    $region44: #{tpu_custom_call.1} parent=1 // pred_region
      %s1658 = ssub.s32 256, 256
      %1659 = vsyncadd [#allocation4], %s1658
      %s1660 = sshll.u32 [#allocation8], 4
      %s1661 = int_to_ptr.vmem [resolvable:$true] %s1660
      %1666 = dma.vmem_to_hbm [thread:$0]  %s1661, 256, %s7, [#allocation4], 128, 128, 8
    $region45: #{tpu_custom_call.1} parent=1 // pred_fallthru
      _
    // Predicated region
    $region46: #{tpu_custom_call.1} parent=1 // pred_check
      _
    $region47: #{tpu_custom_call.1} parent=1 // pred_check_branch
      %1668 = sbr.rel (0) target = $region49
    $region48: #{tpu_custom_call.1} parent=1 // pred_region
      %1669 = dma.done [#allocation4], 256
    $region49: #{tpu_custom_call.1} parent=1 // pred_fallthru
      _
    %1670 = vsyncpa [#allocation3], 1
    %1671 = vsyncpa [#allocation6], 1
    %1672 = vsyncpa [#allocation4], 1

</llo_original>
